<compile_context>
chip_gen: v7x
topology: tpu7x:2x2x1
jax: 0.10.0
libtpu: 0.0.40
codegen_flags: <defaults>
</compile_context>

<pallas_src>
import math

import jax
import jax.numpy as jnp
from jax import lax
from jax.experimental import pallas as pl
from jax.experimental.pallas import tpu as pltpu


# ----------------------------------------------------------------------------
# Fused kernel: per-batch QKV projection + scaled-dot-product attention.
# ----------------------------------------------------------------------------
def _fused_qkv_attn_kernel(x_ref, w_ref, b_ref, o_ref):
    # x_ref: (1, S, D)  w_ref: (3, D, D)  b_ref: (3, 1, D)  o_ref: (1, S, D)
    x = x_ref[0]                                                     # (S, D)

    # QKV projection (softmax scale already folded into w_ref[0]/b_ref[0]).
    q = jnp.dot(x, w_ref[0], preferred_element_type=jnp.float32) + b_ref[0]
    k = jnp.dot(x, w_ref[1], preferred_element_type=jnp.float32) + b_ref[1]
    v = jnp.dot(x, w_ref[2], preferred_element_type=jnp.float32) + b_ref[2]

    # q @ k^T, contracting the last dims -> no materialized transpose of k.
    s = lax.dot_general(q, k, (((1,), (1,)), ((), ())),
                        preferred_element_type=jnp.float32)          # (S, S)

    # Full softmax over the resident sequence (numerically stable).
    m = jnp.max(s, axis=-1, keepdims=True)
    p = jnp.exp(s - m)
    l = jnp.sum(p, axis=-1, keepdims=True)

    o = jnp.dot(p, v, preferred_element_type=jnp.float32) / l        # exact divide
    o_ref[0] = o.astype(o_ref.dtype)


# ----------------------------------------------------------------------------
# Wrapper.
# ----------------------------------------------------------------------------
def prepare_qkv_params(wq, bq, wk, bk, wv, bv, *, num_heads=1):
    """Fold the softmax scale into the q projection and stack the params once."""
    D = wq.shape[0]
    head_dim = D // num_heads
    scale = 1.0 / math.sqrt(head_dim)
    w_stack = jnp.stack([wq * scale, wk, wv], axis=0)                # (3, D, D)
    b_stack = jnp.stack([(bq * scale).reshape(1, D),
                         bk.reshape(1, D),
                         bv.reshape(1, D)], axis=0)                  # (3, 1, D)
    return w_stack, b_stack


def sdpa_model(x, w_stack, b_stack):
    """x: (B, S, D); w_stack: (3, D, D) pre-transposed; b_stack: (3, 1, D)."""
    B, S, D = x.shape

    return pl.pallas_call(
        _fused_qkv_attn_kernel,
        out_shape=jax.ShapeDtypeStruct((B, S, D), x.dtype),
        grid_spec=pltpu.PrefetchScalarGridSpec(
            num_scalar_prefetch=0,
            grid=(B,),
            in_specs=[
                pl.BlockSpec((1, S, D), lambda b: (b, 0, 0)),        # x (per batch)
                pl.BlockSpec((3, D, D), lambda b: (0, 0, 0)),        # stacked weights
                pl.BlockSpec((3, 1, D), lambda b: (0, 0, 0)),        # stacked biases
            ],
            out_specs=pl.BlockSpec((1, S, D), lambda b: (b, 0, 0)),
        ),
        compiler_params=pltpu.CompilerParams(
            dimension_semantics=("parallel",)),
    )(x, w_stack, b_stack)


def _reference(x, wq, bq, wk, bk, wv, bv, *, num_heads=1):
    B, S, D = x.shape
    scale = 1.0 / math.sqrt(D // num_heads)
    q = x @ wq + bq
    k = x @ wk + bk
    v = x @ wv + bv
    s = jnp.einsum("bqd,bkd->bqk", q, k) * scale
    p = jax.nn.softmax(s, axis=-1)
    return jnp.einsum("bqk,bkd->bqd", p, v)


if __name__ == "__main__":
    # Small shapes consistent with the module (d_model = width of the given
    # input = 16, single head); seq long enough to exercise the attention path.
    B, S, D = 2, 256, 16
    num_heads = 1

    key = jax.random.PRNGKey(0)
    kx, kwq, kbq, kwk, kbk, kwv, kbv = jax.random.split(key, 7)

    x = jax.random.normal(kx, (B, S, D), dtype=jnp.float32)

    # Deterministic Linear(d_model, d_model) params (PyTorch-style uniform init),
    # stored pre-transposed so y = x @ W + b.
    bound = 1.0 / math.sqrt(D)
    init = lambda k_, shape: jax.random.uniform(k_, shape, jnp.float32, -bound, bound)
    wq, wk, wv = init(kwq, (D, D)), init(kwk, (D, D)), init(kwv, (D, D))
    bq, bk, bv = init(kbq, (1, D)), init(kbk, (1, D)), init(kbv, (1, D))

    # One-time param prep (scale folding + stacking), hoisted out of the model call.
    w_stack, b_stack = prepare_qkv_params(wq, bq, wk, bk, wv, bv, num_heads=num_heads)

    out = sdpa_model(x, w_stack, b_stack)
    out = jax.block_until_ready(out)

    ref = _reference(x, wq, bq, wk, bk, wv, bv, num_heads=num_heads)
    assert out.shape == (B, S, D)
    max_err = float(jnp.max(jnp.abs(out - ref)))
    assert jnp.allclose(out, ref, atol=1e-4, rtol=1e-4), (
        f"mismatch vs reference (max |err| = {max_err})")

    print("KERNEL_OK")
</pallas_src>

<mosaic_0001>
module attributes {stable_mosaic.version = 11 : i64} {
  func.func @_fused_qkv_attn_kernel(%arg0: i32, %arg1: memref<1x256x16xf32, #tpu.memory_space<vmem>>, %arg2: memref<3x16x16xf32, #tpu.memory_space<vmem>>, %arg3: memref<3x1x16xf32, #tpu.memory_space<vmem>>, %arg4: memref<1x256x16xf32, #tpu.memory_space<vmem>>) attributes {dimension_semantics = [#tpu.dimension_semantics<parallel>], iteration_bounds = array<i64: 2>, scalar_prefetch = 0 : i64, scratch_operands = 0 : i64, tpu.core_type = #tpu.core_type<tc>, window_params = [{transform_indices = @transform_0, window_bounds = array<i64: 1, 256, 16>}, {pipeline_mode = #tpu.pipeline_mode<synchronous>, transform_indices = @transform_1, window_bounds = array<i64: 3, 16, 16>}, {pipeline_mode = #tpu.pipeline_mode<synchronous>, transform_indices = @transform_2, window_bounds = array<i64: 3, 1, 16>}, {transform_indices = @transform_3, window_bounds = array<i64: 1, 256, 16>}]} {
    %c0 = arith.constant 0 : index
    %c0_0 = arith.constant 0 : index
    %c0_1 = arith.constant 0 : index
    %0 = vector.load %arg1[%c0, %c0_0, %c0_1] : memref<1x256x16xf32, #tpu.memory_space<vmem>>, vector<1x256x16xf32>
    %1 = vector.shape_cast %0 : vector<1x256x16xf32> to vector<256x16xf32>
    %c0_2 = arith.constant 0 : index
    %c0_3 = arith.constant 0 : index
    %c0_4 = arith.constant 0 : index
    %2 = vector.load %arg2[%c0_2, %c0_3, %c0_4] : memref<3x16x16xf32, #tpu.memory_space<vmem>>, vector<1x16x16xf32>
    %3 = vector.shape_cast %2 : vector<1x16x16xf32> to vector<16x16xf32>
    %cst = arith.constant dense<0.000000e+00> : vector<256x16xf32>
    %4 = tpu.matmul %1, %3, %cst {dimension_numbers = #tpu.dot_dimension_numbers<[1], [0], [0], [1], [0, 0, 1, 1], [], []>} : vector<256x16xf32>, vector<16x16xf32>, vector<256x16xf32> -> vector<256x16xf32>
    %c0_5 = arith.constant 0 : index
    %c0_6 = arith.constant 0 : index
    %c0_7 = arith.constant 0 : index
    %5 = vector.load %arg3[%c0_5, %c0_6, %c0_7] : memref<3x1x16xf32, #tpu.memory_space<vmem>>, vector<1x1x16xf32>
    %6 = vector.shape_cast %5 : vector<1x1x16xf32> to vector<1x16xf32>
    %7 = vector.broadcast %6 : vector<1x16xf32> to vector<256x16xf32>
    %8 = arith.addf %4, %7 : vector<256x16xf32>
    %c1 = arith.constant 1 : index
    %c0_8 = arith.constant 0 : index
    %c0_9 = arith.constant 0 : index
    %9 = vector.load %arg2[%c1, %c0_8, %c0_9] : memref<3x16x16xf32, #tpu.memory_space<vmem>>, vector<1x16x16xf32>
    %10 = vector.shape_cast %9 : vector<1x16x16xf32> to vector<16x16xf32>
    %cst_10 = arith.constant dense<0.000000e+00> : vector<256x16xf32>
    %11 = tpu.matmul %1, %10, %cst_10 {dimension_numbers = #tpu.dot_dimension_numbers<[1], [0], [0], [1], [0, 0, 1, 1], [], []>} : vector<256x16xf32>, vector<16x16xf32>, vector<256x16xf32> -> vector<256x16xf32>
    %c1_11 = arith.constant 1 : index
    %c0_12 = arith.constant 0 : index
    %c0_13 = arith.constant 0 : index
    %12 = vector.load %arg3[%c1_11, %c0_12, %c0_13] : memref<3x1x16xf32, #tpu.memory_space<vmem>>, vector<1x1x16xf32>
    %13 = vector.shape_cast %12 : vector<1x1x16xf32> to vector<1x16xf32>
    %14 = vector.broadcast %13 : vector<1x16xf32> to vector<256x16xf32>
    %15 = arith.addf %11, %14 : vector<256x16xf32>
    %c2 = arith.constant 2 : index
    %c0_14 = arith.constant 0 : index
    %c0_15 = arith.constant 0 : index
    %16 = vector.load %arg2[%c2, %c0_14, %c0_15] : memref<3x16x16xf32, #tpu.memory_space<vmem>>, vector<1x16x16xf32>
    %17 = vector.shape_cast %16 : vector<1x16x16xf32> to vector<16x16xf32>
    %cst_16 = arith.constant dense<0.000000e+00> : vector<256x16xf32>
    %18 = tpu.matmul %1, %17, %cst_16 {dimension_numbers = #tpu.dot_dimension_numbers<[1], [0], [0], [1], [0, 0, 1, 1], [], []>} : vector<256x16xf32>, vector<16x16xf32>, vector<256x16xf32> -> vector<256x16xf32>
    %c2_17 = arith.constant 2 : index
    %c0_18 = arith.constant 0 : index
    %c0_19 = arith.constant 0 : index
    %19 = vector.load %arg3[%c2_17, %c0_18, %c0_19] : memref<3x1x16xf32, #tpu.memory_space<vmem>>, vector<1x1x16xf32>
    %20 = vector.shape_cast %19 : vector<1x1x16xf32> to vector<1x16xf32>
    %21 = vector.broadcast %20 : vector<1x16xf32> to vector<256x16xf32>
    %22 = arith.addf %18, %21 : vector<256x16xf32>
    %cst_20 = arith.constant dense<0.000000e+00> : vector<256x256xf32>
    %23 = tpu.matmul %8, %15, %cst_20 {dimension_numbers = #tpu.dot_dimension_numbers<[1], [1], [0], [0], [0, 0, 1, 0], [], []>} : vector<256x16xf32>, vector<256x16xf32>, vector<256x256xf32> -> vector<256x256xf32>
    %cst_21 = arith.constant dense<0xFF800000> : vector<256xf32>
    %24 = vector.multi_reduction <maximumf>, %23, %cst_21 [1] : vector<256x256xf32> to vector<256xf32>
    %25 = vector.shape_cast %24 : vector<256xf32> to vector<256x1xf32>
    %26 = vector.broadcast %25 : vector<256x1xf32> to vector<256x256xf32>
    %27 = arith.subf %23, %26 : vector<256x256xf32>
    %28 = math.exp %27 : vector<256x256xf32>
    %cst_22 = arith.constant dense<0.000000e+00> : vector<256xf32>
    %29 = vector.multi_reduction <add>, %28, %cst_22 [1] : vector<256x256xf32> to vector<256xf32>
    %30 = vector.shape_cast %29 : vector<256xf32> to vector<256x1xf32>
    %cst_23 = arith.constant dense<0.000000e+00> : vector<256x16xf32>
    %31 = tpu.matmul %28, %22, %cst_23 {dimension_numbers = #tpu.dot_dimension_numbers<[1], [0], [0], [1], [0, 0, 1, 1], [], []>} : vector<256x256xf32>, vector<256x16xf32>, vector<256x16xf32> -> vector<256x16xf32>
    %32 = vector.broadcast %30 : vector<256x1xf32> to vector<256x16xf32>
    %33 = arith.divf %31, %32 : vector<256x16xf32>
    %c0_24 = arith.constant 0 : index
    %c0_25 = arith.constant 0 : index
    %c0_26 = arith.constant 0 : index
    %34 = vector.load %arg4[%c0_24, %c0_25, %c0_26] : memref<1x256x16xf32, #tpu.memory_space<vmem>>, vector<1x256x16xf32>
    %35 = vector.shape_cast %34 : vector<1x256x16xf32> to vector<256x16xf32>
    %36 = vector.shape_cast %33 : vector<256x16xf32> to vector<1x256x16xf32>
    tpu.vector_store %arg4[%c0_24, %c0_25, %c0_26], %36 {strides = array<i32>} : memref<1x256x16xf32, #tpu.memory_space<vmem>>, vector<1x256x16xf32>,
    return
  }
  func.func @transform_0(%arg0: i32) -> (i32, i32, i32) {
    %c0_i32 = arith.constant 0 : i32
    %c0_i32_0 = arith.constant 0 : i32
    %c0_i32_1 = arith.constant 0 : i32
    return %arg0, %c0_i32, %c0_i32_0 : i32, i32, i32
  }
  func.func @transform_1(%arg0: i32) -> (i32, i32, i32) {
    %c0_i32 = arith.constant 0 : i32
    %c0_i32_0 = arith.constant 0 : i32
    %c0_i32_1 = arith.constant 0 : i32
    %c0_i32_2 = arith.constant 0 : i32
    return %c0_i32, %c0_i32_0, %c0_i32_1 : i32, i32, i32
  }
  func.func @transform_2(%arg0: i32) -> (i32, i32, i32) {
    %c0_i32 = arith.constant 0 : i32
    %c0_i32_0 = arith.constant 0 : i32
    %c0_i32_1 = arith.constant 0 : i32
    %c0_i32_2 = arith.constant 0 : i32
    return %c0_i32, %c0_i32_0, %c0_i32_1 : i32, i32, i32
  }
  func.func @transform_3(%arg0: i32) -> (i32, i32, i32) {
    %c0_i32 = arith.constant 0 : i32
    %c0_i32_0 = arith.constant 0 : i32
    %c0_i32_1 = arith.constant 0 : i32
    return %arg0, %c0_i32, %c0_i32_0 : i32, i32, i32
  }
}

</mosaic_0001>

<llo_original>
// kernel: tpu_custom_call.1
$region0: #{tpu_custom_call.1}
  #allocation0 [shape = 'u32[]', space=smem, size = 0x4, offset = 0x4, fixed_abs, tag = 'smem constant byte address 0x4 - core index']
  #allocation1 [shape = 'u32[144,128]{1,0:T(1,128)}', space=vmem, size = 0x12000, scoped, tag = 'internal scratch']
  %s0 = inlined_call_operand.vmem [shape: f32[2,256,16], index: 0, kind: input, shape index: {}]
  %s1 = inlined_call_operand.vmem [shape: f32[3,16,16], index: 1, kind: input, shape index: {}]
  %s2 = inlined_call_operand.vmem [shape: f32[3,1,16], index: 2, kind: input, shape index: {}]
  %s3 = inlined_call_operand.vmem [shape: f32[2,256,16], index: 3, kind: output, shape index: {}]
  %s4 = sld [smem:[#allocation0]]
  $region45: #{tpu_custom_call.1} parent=0
    _
  %s6 = ssub.s32 1, %s4
  %s7 = scalar_select 0, %s6, %s4
  loop: start=0, step=1, limit=4
  $region2: #{tpu_custom_call.1} parent=0 // loop_pre_header
    _
  $region3: #{tpu_custom_call.1} parent=0 // loop_header
    %s9 = sphi 0, %s13
    %p10 = scmp.ge.s32.totalorder %s9, 4
    %s19 = sphi 0, %s21
    %s22 = sphi 0, %s19
    %s23 = sphi 0, %s22
    %s39 = sphi 0, %s23
    %s43 = sphi 0, %s43
    %s45 = sphi 0, %s43
    %s46 = sphi 0, %s45
    %s60 = sphi 0, %s46
    %s64 = sphi 0, %s64
    %s66 = sphi 0, %s64
    %s67 = sphi 0, %s66
    %s81 = sphi 0, %s67
    %s87 = sphi 0, %s89
    %s90 = sphi 0, %s87
    %s91 = sphi 0, %s90
    %s107 = sphi 0, %s91
  $region4: #{tpu_custom_call.1} parent=0 // loop_header_branch
    %12 = sbr.rel (%p10) target = $region8
  $region5: #{tpu_custom_call.1} parent=0 // loop_body
    %s14 = ssub.s32 %s9, 1
    %s15 = ssub.s32 %s9, 2
    %s16 = sadd.s32 %s9, 1
    %s17 = ssub.s32 %s9, %s16
    %p18 = scmp.eq.s32.totalorder %s17, 0
    %s20 = sadd.s32 %s19, 1
    %s21 = scalar_select %p18, %s19, %s20
    %p24 = pneg %p18
    %p25 = scmp.eq.s32.totalorder %s9, 1
    %p26 = por %p24, %p25
    %p27 = scmp.ne.s32.totalorder %s19, %s22
    %p28 = scmp.eq.s32.totalorder %s9, 0
    %p29 = por %p27, %p28
    %p30 = scmp.ne.s32.totalorder %s19, %s22
    %p31 = scmp.eq.s32.totalorder %s14, 1
    %p32 = por %p30, %p31
    %p33 = scmp.ne.s32.totalorder %s22, %s23
    %p34 = scmp.eq.s32.totalorder %s14, 0
    %p35 = por %p33, %p34
    %p36 = scmp.ne.s32.totalorder %s22, %s23
    %p37 = scmp.eq.s32.totalorder %s15, 1
    %p38 = por %p36, %p37
    %p40 = scmp.ne.s32.totalorder %s23, %s39
    %p41 = scmp.eq.s32.totalorder %s15, 0
    %p42 = por %p40, %p41
    %s44 = sadd.s32 %s43, 1
    %p47 = scmp.eq.s32.totalorder %s9, 1
    %p48 = scmp.ne.s32.totalorder %s43, %s45
    %p49 = scmp.eq.s32.totalorder %s9, 0
    %p50 = por %p48, %p49
    %p51 = scmp.ne.s32.totalorder %s43, %s45
    %p52 = scmp.eq.s32.totalorder %s14, 1
    %p53 = por %p51, %p52
    %p54 = scmp.ne.s32.totalorder %s45, %s46
    %p55 = scmp.eq.s32.totalorder %s14, 0
    %p56 = por %p54, %p55
    %p57 = scmp.ne.s32.totalorder %s45, %s46
    %p58 = scmp.eq.s32.totalorder %s15, 1
    %p59 = por %p57, %p58
    %p61 = scmp.ne.s32.totalorder %s46, %s60
    %p62 = scmp.eq.s32.totalorder %s15, 0
    %p63 = por %p61, %p62
    %s65 = sadd.s32 %s64, 1
    %p68 = scmp.eq.s32.totalorder %s9, 1
    %p69 = scmp.ne.s32.totalorder %s64, %s66
    %p70 = scmp.eq.s32.totalorder %s9, 0
    %p71 = por %p69, %p70
    %p72 = scmp.ne.s32.totalorder %s64, %s66
    %p73 = scmp.eq.s32.totalorder %s14, 1
    %p74 = por %p72, %p73
    %p75 = scmp.ne.s32.totalorder %s66, %s67
    %p76 = scmp.eq.s32.totalorder %s14, 0
    %p77 = por %p75, %p76
    %p78 = scmp.ne.s32.totalorder %s66, %s67
    %p79 = scmp.eq.s32.totalorder %s15, 1
    %p80 = por %p78, %p79
    %p82 = scmp.ne.s32.totalorder %s67, %s81
    %p83 = scmp.eq.s32.totalorder %s15, 0
    %p84 = por %p82, %p83
    %s85 = ssub.s32 %s9, %s16
    %p86 = scmp.eq.s32.totalorder %s85, 0
    %s88 = sadd.s32 %s87, 1
    %s89 = scalar_select %p86, %s87, %s88
    %p92 = pneg %p86
    %p93 = scmp.eq.s32.totalorder %s9, 1
    %p94 = por %p92, %p93
    %p95 = scmp.ne.s32.totalorder %s87, %s90
    %p96 = scmp.eq.s32.totalorder %s9, 0
    %p97 = por %p95, %p96
    %p98 = scmp.ne.s32.totalorder %s87, %s90
    %p99 = scmp.eq.s32.totalorder %s14, 1
    %p100 = por %p98, %p99
    %p101 = scmp.ne.s32.totalorder %s90, %s91
    %p102 = scmp.eq.s32.totalorder %s14, 0
    %p103 = por %p101, %p102
    %p104 = scmp.ne.s32.totalorder %s90, %s91
    %p105 = scmp.eq.s32.totalorder %s15, 1
    %p106 = por %p104, %p105
    %p108 = scmp.ne.s32.totalorder %s91, %s107
    %p109 = scmp.eq.s32.totalorder %s15, 0
    %p110 = por %p108, %p109
    %p111 = scmp.le.s32.totalorder 1, %s9
    %p112 = scmp.lt.s32.totalorder %s9, 3
    %p113 = pnand %p111, %p112
    %p114 = pneg %p113
    // Predicated region
    $region9: #{tpu_custom_call.1} parent=5 // pred_check
      _
    $region10: #{tpu_custom_call.1} parent=5 // pred_check_branch
      %116 = sbr.rel (%p113) target = $region12
    $region11: #{tpu_custom_call.1} parent=5 // pred_region
      %s117 = ssub.s32 %s9, 1
      // Predicated region
      $region13: #{tpu_custom_call.1} parent=11 // pred_check
        %p118 = pneg %p56
      $region14: #{tpu_custom_call.1} parent=11 // pred_check_branch
        %120 = sbr.rel (%p118) target = $region16
      $region15: #{tpu_custom_call.1} parent=11 // pred_region
        _
      $region16: #{tpu_custom_call.1} parent=11 // pred_fallthru
        _
      // Predicated region
      $region17: #{tpu_custom_call.1} parent=11 // pred_check
        %p121 = pneg %p77
      $region18: #{tpu_custom_call.1} parent=11 // pred_check_branch
        %123 = sbr.rel (%p121) target = $region20
      $region19: #{tpu_custom_call.1} parent=11 // pred_region
        _
      $region20: #{tpu_custom_call.1} parent=11 // pred_fallthru
        _
    $region12: #{tpu_custom_call.1} parent=5 // pred_fallthru
      _
    %p124 = scmp.lt.s32.totalorder %s9, 2
    // Predicated region
    $region21: #{tpu_custom_call.1} parent=5 // pred_check
      %p125 = pneg %p124
    $region22: #{tpu_custom_call.1} parent=5 // pred_check_branch
      %127 = sbr.rel (%p125) target = $region24
    $region23: #{tpu_custom_call.1} parent=5 // pred_region
      // Predicated region
      $region25: #{tpu_custom_call.1} parent=23 // pred_check
        %p128 = pneg %p29
      $region26: #{tpu_custom_call.1} parent=23 // pred_check_branch
        %130 = sbr.rel (%p128) target = $region28
      $region27: #{tpu_custom_call.1} parent=23 // pred_region
        %p131 = scmp.lt.s32.totalorder %s9, 1
        %s132 = scalar_select %p131, %s9, 1
        %s133 = smul.addr %s132, 32
        %s134 = smul.addr %s133, 8
        %s135 = scalar_lea.vmem %s0, %s134
      $region28: #{tpu_custom_call.1} parent=23 // pred_fallthru
        _
    $region24: #{tpu_custom_call.1} parent=5 // pred_fallthru
      _
    %p136 = scmp.le.s32.totalorder 1, %s9
    %p137 = scmp.lt.s32.totalorder %s9, 3
    %p138 = pnand %p136, %p137
    %p139 = pneg %p138
    // Predicated region
    $region29: #{tpu_custom_call.1} parent=5 // pred_check
      _
    $region30: #{tpu_custom_call.1} parent=5 // pred_check_branch
      %141 = sbr.rel (%p138) target = $region32
    $region31: #{tpu_custom_call.1} parent=5 // pred_region
      %s142 = ssub.s32 %s9, 1
      %p143 = scmp.lt.s32.totalorder %s14, 1
      %s144 = scalar_select %p143, %s14, 1
      %s145 = smul.addr %s144, 32
      %s146 = smul.addr %s145, 8
      %s147 = scalar_lea.vmem %s0, %s146
      %p148 = pneg %p35
      %p149 = pneg %p32
      %p150 = pneg %p56
      %p151 = pneg %p53
      %p152 = pneg %p77
      %p153 = pneg %p74
      %p154 = pneg %p103
      %p155 = pneg %p100
      %p156 = scmp.lt.s32.totalorder %s14, 1
      %s157 = scalar_select %p156, %s14, 1
      %s158 = smul.addr %s157, 32
      %s159 = smul.addr %s158, 8
      %s160 = scalar_lea.vmem %s3, %s159
      %p161 = scmp.lt.s32.totalorder %s14, 1
      %s162 = scalar_select %p161, %s14, 1
      %s163 = smul.addr %s162, 32
      %s164 = smul.addr %s163, 8
      %s165 = scalar_lea.vmem %s0, %s164
      %p166 = scmp.lt.s32.totalorder %s14, 1
      %s167 = scalar_select %p166, %s14, 1
      %s168 = smul.addr %s167, 32
      %s169 = smul.addr %s168, 8
      %s170 = scalar_lea.vmem %s3, %s169
      %v171 = vld [vmem:[%s165] sm:$0xff]
      %v172 = vld [vmem:[%s165 + $0x8] sm:$0xff]
      %v173 = vld [vmem:[%s165 + $0x10] sm:$0xff]
      %v174 = vld [vmem:[%s165 + $0x18] sm:$0xff]
      %v175 = vld [vmem:[%s165 + $0x20] sm:$0xff]
      %v176 = vld [vmem:[%s165 + $0x28] sm:$0xff]
      %v177 = vld [vmem:[%s165 + $0x30] sm:$0xff]
      %v178 = vld [vmem:[%s165 + $0x38] sm:$0xff]
      %v179 = vld [vmem:[%s165 + $0x40] sm:$0xff]
      %v180 = vld [vmem:[%s165 + $0x48] sm:$0xff]
      %v181 = vld [vmem:[%s165 + $0x50] sm:$0xff]
      %v182 = vld [vmem:[%s165 + $0x58] sm:$0xff]
      %v183 = vld [vmem:[%s165 + $0x60] sm:$0xff]
      %v184 = vld [vmem:[%s165 + $0x68] sm:$0xff]
      %v185 = vld [vmem:[%s165 + $0x70] sm:$0xff]
      %v186 = vld [vmem:[%s165 + $0x78] sm:$0xff]
      %v187 = vld [vmem:[%s165 + $0x80] sm:$0xff]
      %v188 = vld [vmem:[%s165 + $0x88] sm:$0xff]
      %v189 = vld [vmem:[%s165 + $0x90] sm:$0xff]
      %v190 = vld [vmem:[%s165 + $0x98] sm:$0xff]
      %v191 = vld [vmem:[%s165 + $0xa0] sm:$0xff]
      %v192 = vld [vmem:[%s165 + $0xa8] sm:$0xff]
      %v193 = vld [vmem:[%s165 + $0xb0] sm:$0xff]
      %v194 = vld [vmem:[%s165 + $0xb8] sm:$0xff]
      %v195 = vld [vmem:[%s165 + $0xc0] sm:$0xff]
      %v196 = vld [vmem:[%s165 + $0xc8] sm:$0xff]
      %v197 = vld [vmem:[%s165 + $0xd0] sm:$0xff]
      %v198 = vld [vmem:[%s165 + $0xd8] sm:$0xff]
      %v199 = vld [vmem:[%s165 + $0xe0] sm:$0xff]
      %v200 = vld [vmem:[%s165 + $0xe8] sm:$0xff]
      %v201 = vld [vmem:[%s165 + $0xf0] sm:$0xff]
      %v202 = vld [vmem:[%s165 + $0xf8] sm:$0xff]
      %v203 = vld [vmem:[%s1] sm:$0xff]
      %v204 = vld [vmem:[%s1 + $0x8] sm:$0xff]
      %v205 = vld [vmem:[%s2] sm:$0x1]
      %v207 = vlaneseq
      %v208 = vshrl.u32 %v207, 7
      %v209 = vsub.s32 0, %v208
      %v210 = vrot.slane %v205, %v209
      %vm212 = vcmask 130048
      %v214 = vsel %vm212, %v171, 0
      %v217 = vsel %vm212, %v172, 0
      %v220 = vsel %vm212, %v173, 0
      %v223 = vsel %vm212, %v174, 0
      %v226 = vsel %vm212, %v175, 0
      %v229 = vsel %vm212, %v176, 0
      %v232 = vsel %vm212, %v177, 0
      %v235 = vsel %vm212, %v178, 0
      %v238 = vsel %vm212, %v179, 0
      %v241 = vsel %vm212, %v180, 0
      %v244 = vsel %vm212, %v181, 0
      %v247 = vsel %vm212, %v182, 0
      %v250 = vsel %vm212, %v183, 0
      %v253 = vsel %vm212, %v184, 0
      %v256 = vsel %vm212, %v185, 0
      %v259 = vsel %vm212, %v186, 0
      %v262 = vsel %vm212, %v187, 0
      %v265 = vsel %vm212, %v188, 0
      %v268 = vsel %vm212, %v189, 0
      %v271 = vsel %vm212, %v190, 0
      %v274 = vsel %vm212, %v191, 0
      %v277 = vsel %vm212, %v192, 0
      %v280 = vsel %vm212, %v193, 0
      %v283 = vsel %vm212, %v194, 0
      %v286 = vsel %vm212, %v195, 0
      %v289 = vsel %vm212, %v196, 0
      %v292 = vsel %vm212, %v197, 0
      %v295 = vsel %vm212, %v198, 0
      %v298 = vsel %vm212, %v199, 0
      %v301 = vsel %vm212, %v200, 0
      %v304 = vsel %vm212, %v201, 0
      %v307 = vsel %vm212, %v202, 0
      %309 = vmatprep.subr.mxu0 0.0
      %310 = vmatpush1.msra.mxu0 %v203
      %311 = vmatprep.subr.mxu0 0.0
      %312 = vmatpush1.msra.mxu0 %v204
      %313 = vmatprep.subr.mxu0 0.0
      %314 = vmatpush1.msra.mxu0 0.0
      %315 = vmatprep.subr.mxu0 0.0
      %316 = vmatpush1.msra.mxu0 0.0
      %317 = vmatprep.subr.mxu0 0.0
      %318 = vmatpush1.msra.mxu0 0.0
      %319 = vmatprep.subr.mxu0 0.0
      %320 = vmatpush1.msra.mxu0 0.0
      %321 = vmatprep.subr.mxu0 0.0
      %322 = vmatpush1.msra.mxu0 0.0
      %323 = vmatprep.subr.mxu0 0.0
      %324 = vmatpush1.msra.mxu0 0.0
      %325 = vmatprep.subr.mxu0 0.0
      %326 = vmatpush1.msra.mxu0 0.0
      %327 = vmatprep.subr.mxu0 0.0
      %328 = vmatpush1.msra.mxu0 0.0
      %329 = vmatprep.subr.mxu0 0.0
      %330 = vmatpush1.msra.mxu0 0.0
      %331 = vmatprep.subr.mxu0 0.0
      %332 = vmatpush1.msra.mxu0 0.0
      %333 = vmatprep.subr.mxu0 0.0
      %334 = vmatpush1.msra.mxu0 0.0
      %335 = vmatprep.subr.mxu0 0.0
      %336 = vmatpush1.msra.mxu0 0.0
      %337 = vmatprep.subr.mxu0 0.0
      %338 = vmatpush1.msra.mxu0 0.0
      %339 = vmatprep.subr.mxu0 0.0
      %340 = vmatpush1.msra.mxu0 0.0
      %341 = vmatprep.subr.mxu0 0.0
      %342 = vmatpush1.msra.mxu0 0.0
      %343 = vmatprep.subr.mxu0 0.0
      %344 = vmatpush1.msra.mxu0 0.0
      %345 = vmatprep.subr.mxu0 0.0
      %346 = vmatpush1.msra.mxu0 0.0
      %347 = vmatprep.subr.mxu0 0.0
      %348 = vmatpush1.msra.mxu0 0.0
      %349 = vmatprep.subr.mxu0 0.0
      %350 = vmatpush1.msra.mxu0 0.0
      %351 = vmatprep.subr.mxu0 0.0
      %352 = vmatpush1.msra.mxu0 0.0
      %353 = vmatprep.subr.mxu0 0.0
      %354 = vmatpush1.msra.mxu0 0.0
      %355 = vmatprep.subr.mxu0 0.0
      %356 = vmatpush1.msra.mxu0 0.0
      %357 = vmatprep.subr.mxu0 0.0
      %358 = vmatpush1.msra.mxu0 0.0
      %359 = vmatprep.subr.mxu0 0.0
      %360 = vmatpush1.msra.mxu0 0.0
      %361 = vmatprep.subr.mxu0 0.0
      %362 = vmatpush1.msra.mxu0 0.0
      %363 = vmatprep.subr.mxu0 0.0
      %364 = vmatpush1.msra.mxu0 0.0
      %365 = vmatprep.subr.mxu0 0.0
      %366 = vmatpush1.msra.mxu0 0.0
      %367 = vmatprep.subr.mxu0 0.0
      %368 = vmatpush1.msra.mxu0 0.0
      %369 = vmatprep.subr.mxu0 0.0
      %370 = vmatpush1.msra.mxu0 0.0
      %371 = vmatprep.subr.mxu0 0.0
      %372 = vmatpush1.msra.mxu0 0.0
      %373 = vmatprep.mubr.f32.mxu0 0.0
      %374 = vmatmul.mubr.f32.gmra.mrb[0].mxu0 %v214
      %v375 = vpop.f32.mrb[0].mxu0
      %v376 = vadd.f32 %v210, %v375
      %v377 = vpop.f32.mrb[0].mxu0
      %378 = vmatprep.mubr.f32.mxu0 0.0
      %379 = vmatmul.mubr.f32.gmra.mrb[0].mxu0 %v217
      %v380 = vpop.f32.mrb[0].mxu0
      %v381 = vadd.f32 %v210, %v380
      %v382 = vpop.f32.mrb[0].mxu0
      %383 = vmatprep.mubr.f32.mxu0 0.0
      %384 = vmatmul.mubr.f32.gmra.mrb[0].mxu0 %v220
      %v385 = vpop.f32.mrb[0].mxu0
      %v386 = vadd.f32 %v210, %v385
      %v387 = vpop.f32.mrb[0].mxu0
      %388 = vmatprep.mubr.f32.mxu0 0.0
      %389 = vmatmul.mubr.f32.gmra.mrb[0].mxu0 %v223
      %v390 = vpop.f32.mrb[0].mxu0
      %v391 = vadd.f32 %v210, %v390
      %v392 = vpop.f32.mrb[0].mxu0
      %393 = vmatprep.mubr.f32.mxu0 0.0
      %394 = vmatmul.mubr.f32.gmra.mrb[0].mxu0 %v226
      %v395 = vpop.f32.mrb[0].mxu0
      %v396 = vadd.f32 %v210, %v395
      %v397 = vpop.f32.mrb[0].mxu0
      %398 = vmatprep.mubr.f32.mxu0 0.0
      %399 = vmatmul.mubr.f32.gmra.mrb[0].mxu0 %v229
      %v400 = vpop.f32.mrb[0].mxu0
      %v401 = vadd.f32 %v210, %v400
      %v402 = vpop.f32.mrb[0].mxu0
      %403 = vmatprep.mubr.f32.mxu0 0.0
      %404 = vmatmul.mubr.f32.gmra.mrb[0].mxu0 %v232
      %v405 = vpop.f32.mrb[0].mxu0
      %v406 = vadd.f32 %v210, %v405
      %v407 = vpop.f32.mrb[0].mxu0
      %408 = vmatprep.mubr.f32.mxu0 0.0
      %409 = vmatmul.mubr.f32.gmra.mrb[0].mxu0 %v235
      %v410 = vpop.f32.mrb[0].mxu0
      %v411 = vadd.f32 %v210, %v410
      %v412 = vpop.f32.mrb[0].mxu0
      %413 = vmatprep.mubr.f32.mxu0 0.0
      %414 = vmatmul.mubr.f32.gmra.mrb[0].mxu0 %v238
      %v415 = vpop.f32.mrb[0].mxu0
      %v416 = vadd.f32 %v210, %v415
      %v417 = vpop.f32.mrb[0].mxu0
      %418 = vmatprep.mubr.f32.mxu0 0.0
      %419 = vmatmul.mubr.f32.gmra.mrb[0].mxu0 %v241
      %v420 = vpop.f32.mrb[0].mxu0
      %v421 = vadd.f32 %v210, %v420
      %v422 = vpop.f32.mrb[0].mxu0
      %423 = vmatprep.mubr.f32.mxu0 0.0
      %424 = vmatmul.mubr.f32.gmra.mrb[0].mxu0 %v244
      %v425 = vpop.f32.mrb[0].mxu0
      %v426 = vadd.f32 %v210, %v425
      %v427 = vpop.f32.mrb[0].mxu0
      %428 = vmatprep.mubr.f32.mxu0 0.0
      %429 = vmatmul.mubr.f32.gmra.mrb[0].mxu0 %v247
      %v430 = vpop.f32.mrb[0].mxu0
      %v431 = vadd.f32 %v210, %v430
      %v432 = vpop.f32.mrb[0].mxu0
      %433 = vmatprep.mubr.f32.mxu0 0.0
      %434 = vmatmul.mubr.f32.gmra.mrb[0].mxu0 %v250
      %v435 = vpop.f32.mrb[0].mxu0
      %v436 = vadd.f32 %v210, %v435
      %v437 = vpop.f32.mrb[0].mxu0
      %438 = vmatprep.mubr.f32.mxu0 0.0
      %439 = vmatmul.mubr.f32.gmra.mrb[0].mxu0 %v253
      %v440 = vpop.f32.mrb[0].mxu0
      %v441 = vadd.f32 %v210, %v440
      %v442 = vpop.f32.mrb[0].mxu0
      %443 = vmatprep.mubr.f32.mxu0 0.0
      %444 = vmatmul.mubr.f32.gmra.mrb[0].mxu0 %v256
      %v445 = vpop.f32.mrb[0].mxu0
      %v446 = vadd.f32 %v210, %v445
      %v447 = vpop.f32.mrb[0].mxu0
      %448 = vmatprep.mubr.f32.mxu0 0.0
      %449 = vmatmul.mubr.f32.gmra.mrb[0].mxu0 %v259
      %v450 = vpop.f32.mrb[0].mxu0
      %v451 = vadd.f32 %v210, %v450
      %v452 = vpop.f32.mrb[0].mxu0
      %453 = vmatprep.mubr.f32.mxu0 0.0
      %454 = vmatmul.mubr.f32.gmra.mrb[0].mxu0 %v262
      %v455 = vpop.f32.mrb[0].mxu0
      %v456 = vadd.f32 %v210, %v455
      %v457 = vpop.f32.mrb[0].mxu0
      %458 = vmatprep.mubr.f32.mxu0 0.0
      %459 = vmatmul.mubr.f32.gmra.mrb[0].mxu0 %v265
      %v460 = vpop.f32.mrb[0].mxu0
      %v461 = vadd.f32 %v210, %v460
      %v462 = vpop.f32.mrb[0].mxu0
      %463 = vmatprep.mubr.f32.mxu0 0.0
      %464 = vmatmul.mubr.f32.gmra.mrb[0].mxu0 %v268
      %v465 = vpop.f32.mrb[0].mxu0
      %v466 = vadd.f32 %v210, %v465
      %v467 = vpop.f32.mrb[0].mxu0
      %468 = vmatprep.mubr.f32.mxu0 0.0
      %469 = vmatmul.mubr.f32.gmra.mrb[0].mxu0 %v271
      %v470 = vpop.f32.mrb[0].mxu0
      %v471 = vadd.f32 %v210, %v470
      %v472 = vpop.f32.mrb[0].mxu0
      %473 = vmatprep.mubr.f32.mxu0 0.0
      %474 = vmatmul.mubr.f32.gmra.mrb[0].mxu0 %v274
      %v475 = vpop.f32.mrb[0].mxu0
      %v476 = vadd.f32 %v210, %v475
      %v477 = vpop.f32.mrb[0].mxu0
      %478 = vmatprep.mubr.f32.mxu0 0.0
      %479 = vmatmul.mubr.f32.gmra.mrb[0].mxu0 %v277
      %v480 = vpop.f32.mrb[0].mxu0
      %v481 = vadd.f32 %v210, %v480
      %v482 = vpop.f32.mrb[0].mxu0
      %483 = vmatprep.mubr.f32.mxu0 0.0
      %484 = vmatmul.mubr.f32.gmra.mrb[0].mxu0 %v280
      %v485 = vpop.f32.mrb[0].mxu0
      %v486 = vadd.f32 %v210, %v485
      %v487 = vpop.f32.mrb[0].mxu0
      %488 = vmatprep.mubr.f32.mxu0 0.0
      %489 = vmatmul.mubr.f32.gmra.mrb[0].mxu0 %v283
      %v490 = vpop.f32.mrb[0].mxu0
      %v491 = vadd.f32 %v210, %v490
      %v492 = vpop.f32.mrb[0].mxu0
      %493 = vmatprep.mubr.f32.mxu0 0.0
      %494 = vmatmul.mubr.f32.gmra.mrb[0].mxu0 %v286
      %v495 = vpop.f32.mrb[0].mxu0
      %v496 = vadd.f32 %v210, %v495
      %v497 = vpop.f32.mrb[0].mxu0
      %498 = vmatprep.mubr.f32.mxu0 0.0
      %499 = vmatmul.mubr.f32.gmra.mrb[0].mxu0 %v289
      %v500 = vpop.f32.mrb[0].mxu0
      %v501 = vadd.f32 %v210, %v500
      %v502 = vpop.f32.mrb[0].mxu0
      %503 = vmatprep.mubr.f32.mxu0 0.0
      %504 = vmatmul.mubr.f32.gmra.mrb[0].mxu0 %v292
      %v505 = vpop.f32.mrb[0].mxu0
      %v506 = vadd.f32 %v210, %v505
      %v507 = vpop.f32.mrb[0].mxu0
      %508 = vmatprep.mubr.f32.mxu0 0.0
      %509 = vmatmul.mubr.f32.gmra.mrb[0].mxu0 %v295
      %v510 = vpop.f32.mrb[0].mxu0
      %v511 = vadd.f32 %v210, %v510
      %v512 = vpop.f32.mrb[0].mxu0
      %513 = vmatprep.mubr.f32.mxu0 0.0
      %514 = vmatmul.mubr.f32.gmra.mrb[0].mxu0 %v298
      %v515 = vpop.f32.mrb[0].mxu0
      %v516 = vadd.f32 %v210, %v515
      %v517 = vpop.f32.mrb[0].mxu0
      %518 = vmatprep.mubr.f32.mxu0 0.0
      %519 = vmatmul.mubr.f32.gmra.mrb[0].mxu0 %v301
      %v520 = vpop.f32.mrb[0].mxu0
      %v521 = vadd.f32 %v210, %v520
      %v522 = vpop.f32.mrb[0].mxu0
      %523 = vmatprep.mubr.f32.mxu0 0.0
      %524 = vmatmul.mubr.f32.gmra.mrb[0].mxu0 %v304
      %v525 = vpop.f32.mrb[0].mxu0
      %v526 = vadd.f32 %v210, %v525
      %v527 = vpop.f32.mrb[0].mxu0
      %528 = vmatprep.mubr.f32.mxu0 0.0
      %529 = vmatmul.mubr.f32.gmra.mrb[0].mxu0 %v307
      %v530 = vpop.f32.mrb[0].mxu0
      %v531 = vadd.f32 %v210, %v530
      %v532 = vpop.f32.mrb[0].mxu0
      %533 = vdwg.mxu0
      %s534 = scalar_lea.vmem %s1, 16
      %v535 = vld [vmem:[%s534] sm:$0xff]
      %v536 = vld [vmem:[%s534 + $0x8] sm:$0xff]
      %s537 = scalar_lea.vmem %s2, 1
      %v538 = vld [vmem:[%s537] sm:$0x1]
      %v540 = vlaneseq
      %v541 = vshrl.u32 %v540, 7
      %v542 = vsub.s32 0, %v541
      %v543 = vrot.slane %v538, %v542
      %545 = vmatprep.subr.mxu0 0.0
      %546 = vmatpush1.msra.mxu0 %v535
      %547 = vmatprep.subr.mxu0 0.0
      %548 = vmatpush1.msra.mxu0 %v536
      %549 = vmatprep.subr.mxu0 0.0
      %550 = vmatpush1.msra.mxu0 0.0
      %551 = vmatprep.subr.mxu0 0.0
      %552 = vmatpush1.msra.mxu0 0.0
      %553 = vmatprep.subr.mxu0 0.0
      %554 = vmatpush1.msra.mxu0 0.0
      %555 = vmatprep.subr.mxu0 0.0
      %556 = vmatpush1.msra.mxu0 0.0
      %557 = vmatprep.subr.mxu0 0.0
      %558 = vmatpush1.msra.mxu0 0.0
      %559 = vmatprep.subr.mxu0 0.0
      %560 = vmatpush1.msra.mxu0 0.0
      %561 = vmatprep.subr.mxu0 0.0
      %562 = vmatpush1.msra.mxu0 0.0
      %563 = vmatprep.subr.mxu0 0.0
      %564 = vmatpush1.msra.mxu0 0.0
      %565 = vmatprep.subr.mxu0 0.0
      %566 = vmatpush1.msra.mxu0 0.0
      %567 = vmatprep.subr.mxu0 0.0
      %568 = vmatpush1.msra.mxu0 0.0
      %569 = vmatprep.subr.mxu0 0.0
      %570 = vmatpush1.msra.mxu0 0.0
      %571 = vmatprep.subr.mxu0 0.0
      %572 = vmatpush1.msra.mxu0 0.0
      %573 = vmatprep.subr.mxu0 0.0
      %574 = vmatpush1.msra.mxu0 0.0
      %575 = vmatprep.subr.mxu0 0.0
      %576 = vmatpush1.msra.mxu0 0.0
      %577 = vmatprep.subr.mxu0 0.0
      %578 = vmatpush1.msra.mxu0 0.0
      %579 = vmatprep.subr.mxu0 0.0
      %580 = vmatpush1.msra.mxu0 0.0
      %581 = vmatprep.subr.mxu0 0.0
      %582 = vmatpush1.msra.mxu0 0.0
      %583 = vmatprep.subr.mxu0 0.0
      %584 = vmatpush1.msra.mxu0 0.0
      %585 = vmatprep.subr.mxu0 0.0
      %586 = vmatpush1.msra.mxu0 0.0
      %587 = vmatprep.subr.mxu0 0.0
      %588 = vmatpush1.msra.mxu0 0.0
      %589 = vmatprep.subr.mxu0 0.0
      %590 = vmatpush1.msra.mxu0 0.0
      %591 = vmatprep.subr.mxu0 0.0
      %592 = vmatpush1.msra.mxu0 0.0
      %593 = vmatprep.subr.mxu0 0.0
      %594 = vmatpush1.msra.mxu0 0.0
      %595 = vmatprep.subr.mxu0 0.0
      %596 = vmatpush1.msra.mxu0 0.0
      %597 = vmatprep.subr.mxu0 0.0
      %598 = vmatpush1.msra.mxu0 0.0
      %599 = vmatprep.subr.mxu0 0.0
      %600 = vmatpush1.msra.mxu0 0.0
      %601 = vmatprep.subr.mxu0 0.0
      %602 = vmatpush1.msra.mxu0 0.0
      %603 = vmatprep.subr.mxu0 0.0
      %604 = vmatpush1.msra.mxu0 0.0
      %605 = vmatprep.subr.mxu0 0.0
      %606 = vmatpush1.msra.mxu0 0.0
      %607 = vmatprep.subr.mxu0 0.0
      %608 = vmatpush1.msra.mxu0 0.0
      %609 = vmatprep.mubr.f32.mxu0 0.0
      %610 = vmatmul.mubr.f32.gmra.mrb[0].mxu0 %v214
      %v611 = vpop.f32.mrb[0].mxu0
      %v612 = vadd.f32 %v543, %v611
      %v613 = vpop.f32.mrb[0].mxu0
      %614 = vmatprep.mubr.f32.mxu0 0.0
      %615 = vmatmul.mubr.f32.gmra.mrb[0].mxu0 %v217
      %v616 = vpop.f32.mrb[0].mxu0
      %v617 = vadd.f32 %v543, %v616
      %v618 = vpop.f32.mrb[0].mxu0
      %619 = vmatprep.mubr.f32.mxu0 0.0
      %620 = vmatmul.mubr.f32.gmra.mrb[0].mxu0 %v220
      %v621 = vpop.f32.mrb[0].mxu0
      %v622 = vadd.f32 %v543, %v621
      %v623 = vpop.f32.mrb[0].mxu0
      %624 = vmatprep.mubr.f32.mxu0 0.0
      %625 = vmatmul.mubr.f32.gmra.mrb[0].mxu0 %v223
      %v626 = vpop.f32.mrb[0].mxu0
      %v627 = vadd.f32 %v543, %v626
      %v628 = vpop.f32.mrb[0].mxu0
      %629 = vmatprep.mubr.f32.mxu0 0.0
      %630 = vmatmul.mubr.f32.gmra.mrb[0].mxu0 %v226
      %v631 = vpop.f32.mrb[0].mxu0
      %v632 = vadd.f32 %v543, %v631
      %v633 = vpop.f32.mrb[0].mxu0
      %634 = vmatprep.mubr.f32.mxu0 0.0
      %635 = vmatmul.mubr.f32.gmra.mrb[0].mxu0 %v229
      %v636 = vpop.f32.mrb[0].mxu0
      %v637 = vadd.f32 %v543, %v636
      %v638 = vpop.f32.mrb[0].mxu0
      %639 = vmatprep.mubr.f32.mxu0 0.0
      %640 = vmatmul.mubr.f32.gmra.mrb[0].mxu0 %v232
      %v641 = vpop.f32.mrb[0].mxu0
      %v642 = vadd.f32 %v543, %v641
      %v643 = vpop.f32.mrb[0].mxu0
      %644 = vmatprep.mubr.f32.mxu0 0.0
      %645 = vmatmul.mubr.f32.gmra.mrb[0].mxu0 %v235
      %v646 = vpop.f32.mrb[0].mxu0
      %v647 = vadd.f32 %v543, %v646
      %v648 = vpop.f32.mrb[0].mxu0
      %649 = vmatprep.mubr.f32.mxu0 0.0
      %650 = vmatmul.mubr.f32.gmra.mrb[0].mxu0 %v238
      %v651 = vpop.f32.mrb[0].mxu0
      %v652 = vadd.f32 %v543, %v651
      %v653 = vpop.f32.mrb[0].mxu0
      %654 = vmatprep.mubr.f32.mxu0 0.0
      %655 = vmatmul.mubr.f32.gmra.mrb[0].mxu0 %v241
      %v656 = vpop.f32.mrb[0].mxu0
      %v657 = vadd.f32 %v543, %v656
      %v658 = vpop.f32.mrb[0].mxu0
      %659 = vmatprep.mubr.f32.mxu0 0.0
      %660 = vmatmul.mubr.f32.gmra.mrb[0].mxu0 %v244
      %v661 = vpop.f32.mrb[0].mxu0
      %v662 = vadd.f32 %v543, %v661
      %v663 = vpop.f32.mrb[0].mxu0
      %664 = vmatprep.mubr.f32.mxu0 0.0
      %665 = vmatmul.mubr.f32.gmra.mrb[0].mxu0 %v247
      %v666 = vpop.f32.mrb[0].mxu0
      %v667 = vadd.f32 %v543, %v666
      %v668 = vpop.f32.mrb[0].mxu0
      %669 = vmatprep.mubr.f32.mxu0 0.0
      %670 = vmatmul.mubr.f32.gmra.mrb[0].mxu0 %v250
      %v671 = vpop.f32.mrb[0].mxu0
      %v672 = vadd.f32 %v543, %v671
      %v673 = vpop.f32.mrb[0].mxu0
      %674 = vmatprep.mubr.f32.mxu0 0.0
      %675 = vmatmul.mubr.f32.gmra.mrb[0].mxu0 %v253
      %v676 = vpop.f32.mrb[0].mxu0
      %v677 = vadd.f32 %v543, %v676
      %v678 = vpop.f32.mrb[0].mxu0
      %679 = vmatprep.mubr.f32.mxu0 0.0
      %680 = vmatmul.mubr.f32.gmra.mrb[0].mxu0 %v256
      %v681 = vpop.f32.mrb[0].mxu0
      %v682 = vadd.f32 %v543, %v681
      %v683 = vpop.f32.mrb[0].mxu0
      %684 = vmatprep.mubr.f32.mxu0 0.0
      %685 = vmatmul.mubr.f32.gmra.mrb[0].mxu0 %v259
      %v686 = vpop.f32.mrb[0].mxu0
      %v687 = vadd.f32 %v543, %v686
      %v688 = vpop.f32.mrb[0].mxu0
      %689 = vmatprep.mubr.f32.mxu0 0.0
      %690 = vmatmul.mubr.f32.gmra.mrb[0].mxu0 %v262
      %v691 = vpop.f32.mrb[0].mxu0
      %v692 = vadd.f32 %v543, %v691
      %v693 = vpop.f32.mrb[0].mxu0
      %694 = vmatprep.mubr.f32.mxu0 0.0
      %695 = vmatmul.mubr.f32.gmra.mrb[0].mxu0 %v265
      %v696 = vpop.f32.mrb[0].mxu0
      %v697 = vadd.f32 %v543, %v696
      %v698 = vpop.f32.mrb[0].mxu0
      %699 = vmatprep.mubr.f32.mxu0 0.0
      %700 = vmatmul.mubr.f32.gmra.mrb[0].mxu0 %v268
      %v701 = vpop.f32.mrb[0].mxu0
      %v702 = vadd.f32 %v543, %v701
      %v703 = vpop.f32.mrb[0].mxu0
      %704 = vmatprep.mubr.f32.mxu0 0.0
      %705 = vmatmul.mubr.f32.gmra.mrb[0].mxu0 %v271
      %v706 = vpop.f32.mrb[0].mxu0
      %v707 = vadd.f32 %v543, %v706
      %v708 = vpop.f32.mrb[0].mxu0
      %709 = vmatprep.mubr.f32.mxu0 0.0
      %710 = vmatmul.mubr.f32.gmra.mrb[0].mxu0 %v274
      %v711 = vpop.f32.mrb[0].mxu0
      %v712 = vadd.f32 %v543, %v711
      %v713 = vpop.f32.mrb[0].mxu0
      %714 = vmatprep.mubr.f32.mxu0 0.0
      %715 = vmatmul.mubr.f32.gmra.mrb[0].mxu0 %v277
      %v716 = vpop.f32.mrb[0].mxu0
      %v717 = vadd.f32 %v543, %v716
      %v718 = vpop.f32.mrb[0].mxu0
      %719 = vmatprep.mubr.f32.mxu0 0.0
      %720 = vmatmul.mubr.f32.gmra.mrb[0].mxu0 %v280
      %v721 = vpop.f32.mrb[0].mxu0
      %v722 = vadd.f32 %v543, %v721
      %v723 = vpop.f32.mrb[0].mxu0
      %724 = vmatprep.mubr.f32.mxu0 0.0
      %725 = vmatmul.mubr.f32.gmra.mrb[0].mxu0 %v283
      %v726 = vpop.f32.mrb[0].mxu0
      %v727 = vadd.f32 %v543, %v726
      %v728 = vpop.f32.mrb[0].mxu0
      %729 = vmatprep.mubr.f32.mxu0 0.0
      %730 = vmatmul.mubr.f32.gmra.mrb[0].mxu0 %v286
      %v731 = vpop.f32.mrb[0].mxu0
      %v732 = vadd.f32 %v543, %v731
      %v733 = vpop.f32.mrb[0].mxu0
      %734 = vmatprep.mubr.f32.mxu0 0.0
      %735 = vmatmul.mubr.f32.gmra.mrb[0].mxu0 %v289
      %v736 = vpop.f32.mrb[0].mxu0
      %v737 = vadd.f32 %v543, %v736
      %v738 = vpop.f32.mrb[0].mxu0
      %739 = vmatprep.mubr.f32.mxu0 0.0
      %740 = vmatmul.mubr.f32.gmra.mrb[0].mxu0 %v292
      %v741 = vpop.f32.mrb[0].mxu0
      %v742 = vadd.f32 %v543, %v741
      %v743 = vpop.f32.mrb[0].mxu0
      %744 = vmatprep.mubr.f32.mxu0 0.0
      %745 = vmatmul.mubr.f32.gmra.mrb[0].mxu0 %v295
      %v746 = vpop.f32.mrb[0].mxu0
      %v747 = vadd.f32 %v543, %v746
      %v748 = vpop.f32.mrb[0].mxu0
      %749 = vmatprep.mubr.f32.mxu0 0.0
      %750 = vmatmul.mubr.f32.gmra.mrb[0].mxu0 %v298
      %v751 = vpop.f32.mrb[0].mxu0
      %v752 = vadd.f32 %v543, %v751
      %v753 = vpop.f32.mrb[0].mxu0
      %754 = vmatprep.mubr.f32.mxu0 0.0
      %755 = vmatmul.mubr.f32.gmra.mrb[0].mxu0 %v301
      %v756 = vpop.f32.mrb[0].mxu0
      %v757 = vadd.f32 %v543, %v756
      %v758 = vpop.f32.mrb[0].mxu0
      %759 = vmatprep.mubr.f32.mxu0 0.0
      %760 = vmatmul.mubr.f32.gmra.mrb[0].mxu0 %v304
      %v761 = vpop.f32.mrb[0].mxu0
      %v762 = vadd.f32 %v543, %v761
      %v763 = vpop.f32.mrb[0].mxu0
      %764 = vmatprep.mubr.f32.mxu0 0.0
      %765 = vmatmul.mubr.f32.gmra.mrb[0].mxu0 %v307
      %v766 = vpop.f32.mrb[0].mxu0
      %v767 = vadd.f32 %v543, %v766
      %v768 = vpop.f32.mrb[0].mxu0
      %769 = vdwg.mxu0
      %s770 = scalar_lea.vmem %s1, 32
      %v771 = vld [vmem:[%s770] sm:$0xff]
      %v772 = vld [vmem:[%s770 + $0x8] sm:$0xff]
      %s773 = scalar_lea.vmem %s2, 2
      %v774 = vld [vmem:[%s773] sm:$0x1]
      %v776 = vlaneseq
      %v777 = vshrl.u32 %v776, 7
      %v778 = vsub.s32 0, %v777
      %v779 = vrot.slane %v774, %v778
      %781 = vmatprep.subr.mxu0 0.0
      %782 = vmatpush1.msra.mxu0 %v771
      %783 = vmatprep.subr.mxu0 0.0
      %784 = vmatpush1.msra.mxu0 %v772
      %785 = vmatprep.subr.mxu0 0.0
      %786 = vmatpush1.msra.mxu0 0.0
      %787 = vmatprep.subr.mxu0 0.0
      %788 = vmatpush1.msra.mxu0 0.0
      %789 = vmatprep.subr.mxu0 0.0
      %790 = vmatpush1.msra.mxu0 0.0
      %791 = vmatprep.subr.mxu0 0.0
      %792 = vmatpush1.msra.mxu0 0.0
      %793 = vmatprep.subr.mxu0 0.0
      %794 = vmatpush1.msra.mxu0 0.0
      %795 = vmatprep.subr.mxu0 0.0
      %796 = vmatpush1.msra.mxu0 0.0
      %797 = vmatprep.subr.mxu0 0.0
      %798 = vmatpush1.msra.mxu0 0.0
      %799 = vmatprep.subr.mxu0 0.0
      %800 = vmatpush1.msra.mxu0 0.0
      %801 = vmatprep.subr.mxu0 0.0
      %802 = vmatpush1.msra.mxu0 0.0
      %803 = vmatprep.subr.mxu0 0.0
      %804 = vmatpush1.msra.mxu0 0.0
      %805 = vmatprep.subr.mxu0 0.0
      %806 = vmatpush1.msra.mxu0 0.0
      %807 = vmatprep.subr.mxu0 0.0
      %808 = vmatpush1.msra.mxu0 0.0
      %809 = vmatprep.subr.mxu0 0.0
      %810 = vmatpush1.msra.mxu0 0.0
      %811 = vmatprep.subr.mxu0 0.0
      %812 = vmatpush1.msra.mxu0 0.0
      %813 = vmatprep.subr.mxu0 0.0
      %814 = vmatpush1.msra.mxu0 0.0
      %815 = vmatprep.subr.mxu0 0.0
      %816 = vmatpush1.msra.mxu0 0.0
      %817 = vmatprep.subr.mxu0 0.0
      %818 = vmatpush1.msra.mxu0 0.0
      %819 = vmatprep.subr.mxu0 0.0
      %820 = vmatpush1.msra.mxu0 0.0
      %821 = vmatprep.subr.mxu0 0.0
      %822 = vmatpush1.msra.mxu0 0.0
      %823 = vmatprep.subr.mxu0 0.0
      %824 = vmatpush1.msra.mxu0 0.0
      %825 = vmatprep.subr.mxu0 0.0
      %826 = vmatpush1.msra.mxu0 0.0
      %827 = vmatprep.subr.mxu0 0.0
      %828 = vmatpush1.msra.mxu0 0.0
      %829 = vmatprep.subr.mxu0 0.0
      %830 = vmatpush1.msra.mxu0 0.0
      %831 = vmatprep.subr.mxu0 0.0
      %832 = vmatpush1.msra.mxu0 0.0
      %833 = vmatprep.subr.mxu0 0.0
      %834 = vmatpush1.msra.mxu0 0.0
      %835 = vmatprep.subr.mxu0 0.0
      %836 = vmatpush1.msra.mxu0 0.0
      %837 = vmatprep.subr.mxu0 0.0
      %838 = vmatpush1.msra.mxu0 0.0
      %839 = vmatprep.subr.mxu0 0.0
      %840 = vmatpush1.msra.mxu0 0.0
      %841 = vmatprep.subr.mxu0 0.0
      %842 = vmatpush1.msra.mxu0 0.0
      %843 = vmatprep.subr.mxu0 0.0
      %844 = vmatpush1.msra.mxu0 0.0
      %845 = vmatprep.mubr.f32.mxu0 0.0
      %846 = vmatmul.mubr.f32.gmra.mrb[0].mxu0 %v214
      %v847 = vpop.f32.mrb[0].mxu0
      %v848 = vadd.f32 %v779, %v847
      %v849 = vpop.f32.mrb[0].mxu0
      %850 = vmatprep.mubr.f32.mxu0 0.0
      %851 = vmatmul.mubr.f32.gmra.mrb[0].mxu0 %v217
      %v852 = vpop.f32.mrb[0].mxu0
      %v853 = vadd.f32 %v779, %v852
      %v854 = vpop.f32.mrb[0].mxu0
      %855 = vmatprep.mubr.f32.mxu0 0.0
      %856 = vmatmul.mubr.f32.gmra.mrb[0].mxu0 %v220
      %v857 = vpop.f32.mrb[0].mxu0
      %v858 = vadd.f32 %v779, %v857
      %v859 = vpop.f32.mrb[0].mxu0
      %860 = vmatprep.mubr.f32.mxu0 0.0
      %861 = vmatmul.mubr.f32.gmra.mrb[0].mxu0 %v223
      %v862 = vpop.f32.mrb[0].mxu0
      %v863 = vadd.f32 %v779, %v862
      %v864 = vpop.f32.mrb[0].mxu0
      %865 = vmatprep.mubr.f32.mxu0 0.0
      %866 = vmatmul.mubr.f32.gmra.mrb[0].mxu0 %v226
      %v867 = vpop.f32.mrb[0].mxu0
      %v868 = vadd.f32 %v779, %v867
      %v869 = vpop.f32.mrb[0].mxu0
      %870 = vmatprep.mubr.f32.mxu0 0.0
      %871 = vmatmul.mubr.f32.gmra.mrb[0].mxu0 %v229
      %v872 = vpop.f32.mrb[0].mxu0
      %v873 = vadd.f32 %v779, %v872
      %v874 = vpop.f32.mrb[0].mxu0
      %875 = vmatprep.mubr.f32.mxu0 0.0
      %876 = vmatmul.mubr.f32.gmra.mrb[0].mxu0 %v232
      %v877 = vpop.f32.mrb[0].mxu0
      %v878 = vadd.f32 %v779, %v877
      %v879 = vpop.f32.mrb[0].mxu0
      %880 = vmatprep.mubr.f32.mxu0 0.0
      %881 = vmatmul.mubr.f32.gmra.mrb[0].mxu0 %v235
      %v882 = vpop.f32.mrb[0].mxu0
      %v883 = vadd.f32 %v779, %v882
      %v884 = vpop.f32.mrb[0].mxu0
      %885 = vmatprep.mubr.f32.mxu0 0.0
      %886 = vmatmul.mubr.f32.gmra.mrb[0].mxu0 %v238
      %v887 = vpop.f32.mrb[0].mxu0
      %v888 = vadd.f32 %v779, %v887
      %v889 = vpop.f32.mrb[0].mxu0
      %890 = vmatprep.mubr.f32.mxu0 0.0
      %891 = vmatmul.mubr.f32.gmra.mrb[0].mxu0 %v241
      %v892 = vpop.f32.mrb[0].mxu0
      %v893 = vadd.f32 %v779, %v892
      %v894 = vpop.f32.mrb[0].mxu0
      %895 = vmatprep.mubr.f32.mxu0 0.0
      %896 = vmatmul.mubr.f32.gmra.mrb[0].mxu0 %v244
      %v897 = vpop.f32.mrb[0].mxu0
      %v898 = vadd.f32 %v779, %v897
      %v899 = vpop.f32.mrb[0].mxu0
      %900 = vmatprep.mubr.f32.mxu0 0.0
      %901 = vmatmul.mubr.f32.gmra.mrb[0].mxu0 %v247
      %v902 = vpop.f32.mrb[0].mxu0
      %v903 = vadd.f32 %v779, %v902
      %v904 = vpop.f32.mrb[0].mxu0
      %905 = vmatprep.mubr.f32.mxu0 0.0
      %906 = vmatmul.mubr.f32.gmra.mrb[0].mxu0 %v250
      %v907 = vpop.f32.mrb[0].mxu0
      %v908 = vadd.f32 %v779, %v907
      %v909 = vpop.f32.mrb[0].mxu0
      %910 = vmatprep.mubr.f32.mxu0 0.0
      %911 = vmatmul.mubr.f32.gmra.mrb[0].mxu0 %v253
      %v912 = vpop.f32.mrb[0].mxu0
      %v913 = vadd.f32 %v779, %v912
      %v914 = vpop.f32.mrb[0].mxu0
      %915 = vmatprep.mubr.f32.mxu0 0.0
      %916 = vmatmul.mubr.f32.gmra.mrb[0].mxu0 %v256
      %v917 = vpop.f32.mrb[0].mxu0
      %v918 = vadd.f32 %v779, %v917
      %v919 = vpop.f32.mrb[0].mxu0
      %920 = vmatprep.mubr.f32.mxu0 0.0
      %921 = vmatmul.mubr.f32.gmra.mrb[0].mxu0 %v259
      %v922 = vpop.f32.mrb[0].mxu0
      %v923 = vadd.f32 %v779, %v922
      %v924 = vpop.f32.mrb[0].mxu0
      %925 = vmatprep.mubr.f32.mxu0 0.0
      %926 = vmatmul.mubr.f32.gmra.mrb[0].mxu0 %v262
      %v927 = vpop.f32.mrb[0].mxu0
      %v928 = vadd.f32 %v779, %v927
      %v929 = vpop.f32.mrb[0].mxu0
      %930 = vmatprep.mubr.f32.mxu0 0.0
      %931 = vmatmul.mubr.f32.gmra.mrb[0].mxu0 %v265
      %v932 = vpop.f32.mrb[0].mxu0
      %v933 = vadd.f32 %v779, %v932
      %v934 = vpop.f32.mrb[0].mxu0
      %935 = vmatprep.mubr.f32.mxu0 0.0
      %936 = vmatmul.mubr.f32.gmra.mrb[0].mxu0 %v268
      %v937 = vpop.f32.mrb[0].mxu0
      %v938 = vadd.f32 %v779, %v937
      %v939 = vpop.f32.mrb[0].mxu0
      %940 = vmatprep.mubr.f32.mxu0 0.0
      %941 = vmatmul.mubr.f32.gmra.mrb[0].mxu0 %v271
      %v942 = vpop.f32.mrb[0].mxu0
      %v943 = vadd.f32 %v779, %v942
      %v944 = vpop.f32.mrb[0].mxu0
      %945 = vmatprep.mubr.f32.mxu0 0.0
      %946 = vmatmul.mubr.f32.gmra.mrb[0].mxu0 %v274
      %v947 = vpop.f32.mrb[0].mxu0
      %v948 = vadd.f32 %v779, %v947
      %v949 = vpop.f32.mrb[0].mxu0
      %950 = vmatprep.mubr.f32.mxu0 0.0
      %951 = vmatmul.mubr.f32.gmra.mrb[0].mxu0 %v277
      %v952 = vpop.f32.mrb[0].mxu0
      %v953 = vadd.f32 %v779, %v952
      %v954 = vpop.f32.mrb[0].mxu0
      %955 = vmatprep.mubr.f32.mxu0 0.0
      %956 = vmatmul.mubr.f32.gmra.mrb[0].mxu0 %v280
      %v957 = vpop.f32.mrb[0].mxu0
      %v958 = vadd.f32 %v779, %v957
      %v959 = vpop.f32.mrb[0].mxu0
      %960 = vmatprep.mubr.f32.mxu0 0.0
      %961 = vmatmul.mubr.f32.gmra.mrb[0].mxu0 %v283
      %v962 = vpop.f32.mrb[0].mxu0
      %v963 = vadd.f32 %v779, %v962
      %v964 = vpop.f32.mrb[0].mxu0
      %965 = vmatprep.mubr.f32.mxu0 0.0
      %966 = vmatmul.mubr.f32.gmra.mrb[0].mxu0 %v286
      %v967 = vpop.f32.mrb[0].mxu0
      %v968 = vadd.f32 %v779, %v967
      %v969 = vpop.f32.mrb[0].mxu0
      %970 = vmatprep.mubr.f32.mxu0 0.0
      %971 = vmatmul.mubr.f32.gmra.mrb[0].mxu0 %v289
      %v972 = vpop.f32.mrb[0].mxu0
      %v973 = vadd.f32 %v779, %v972
      %v974 = vpop.f32.mrb[0].mxu0
      %975 = vmatprep.mubr.f32.mxu0 0.0
      %976 = vmatmul.mubr.f32.gmra.mrb[0].mxu0 %v292
      %v977 = vpop.f32.mrb[0].mxu0
      %v978 = vadd.f32 %v779, %v977
      %v979 = vpop.f32.mrb[0].mxu0
      %980 = vmatprep.mubr.f32.mxu0 0.0
      %981 = vmatmul.mubr.f32.gmra.mrb[0].mxu0 %v295
      %v982 = vpop.f32.mrb[0].mxu0
      %v983 = vadd.f32 %v779, %v982
      %v984 = vpop.f32.mrb[0].mxu0
      %985 = vmatprep.mubr.f32.mxu0 0.0
      %986 = vmatmul.mubr.f32.gmra.mrb[0].mxu0 %v298
      %v987 = vpop.f32.mrb[0].mxu0
      %v988 = vadd.f32 %v779, %v987
      %v989 = vpop.f32.mrb[0].mxu0
      %990 = vmatprep.mubr.f32.mxu0 0.0
      %991 = vmatmul.mubr.f32.gmra.mrb[0].mxu0 %v301
      %v992 = vpop.f32.mrb[0].mxu0
      %v993 = vadd.f32 %v779, %v992
      %v994 = vpop.f32.mrb[0].mxu0
      %995 = vmatprep.mubr.f32.mxu0 0.0
      %996 = vmatmul.mubr.f32.gmra.mrb[0].mxu0 %v304
      %v997 = vpop.f32.mrb[0].mxu0
      %v998 = vadd.f32 %v779, %v997
      %v999 = vpop.f32.mrb[0].mxu0
      %1000 = vmatprep.mubr.f32.mxu0 0.0
      %1001 = vmatmul.mubr.f32.gmra.mrb[0].mxu0 %v307
      %v1002 = vpop.f32.mrb[0].mxu0
      %v1003 = vadd.f32 %v779, %v1002
      %v1004 = vpop.f32.mrb[0].mxu0
      %1005 = vdwg.mxu0
      %v1007 = vsel %vm212, %v376, 0
      %v1010 = vsel %vm212, %v381, 0
      %v1013 = vsel %vm212, %v386, 0
      %v1016 = vsel %vm212, %v391, 0
      %v1019 = vsel %vm212, %v396, 0
      %v1022 = vsel %vm212, %v401, 0
      %v1025 = vsel %vm212, %v406, 0
      %v1028 = vsel %vm212, %v411, 0
      %v1031 = vsel %vm212, %v416, 0
      %v1034 = vsel %vm212, %v421, 0
      %v1037 = vsel %vm212, %v426, 0
      %v1040 = vsel %vm212, %v431, 0
      %v1043 = vsel %vm212, %v436, 0
      %v1046 = vsel %vm212, %v441, 0
      %v1049 = vsel %vm212, %v446, 0
      %v1052 = vsel %vm212, %v451, 0
      %v1055 = vsel %vm212, %v456, 0
      %v1058 = vsel %vm212, %v461, 0
      %v1061 = vsel %vm212, %v466, 0
      %v1064 = vsel %vm212, %v471, 0
      %v1067 = vsel %vm212, %v476, 0
      %v1070 = vsel %vm212, %v481, 0
      %v1073 = vsel %vm212, %v486, 0
      %v1076 = vsel %vm212, %v491, 0
      %v1079 = vsel %vm212, %v496, 0
      %v1082 = vsel %vm212, %v501, 0
      %v1085 = vsel %vm212, %v506, 0
      %v1088 = vsel %vm212, %v511, 0
      %v1091 = vsel %vm212, %v516, 0
      %v1094 = vsel %vm212, %v521, 0
      %v1097 = vsel %vm212, %v526, 0
      %v1100 = vsel %vm212, %v531, 0
      %v1103 = vsel %vm212, %v612, 0
      %v1106 = vsel %vm212, %v617, 0
      %v1109 = vsel %vm212, %v622, 0
      %v1112 = vsel %vm212, %v627, 0
      %v1115 = vsel %vm212, %v632, 0
      %v1118 = vsel %vm212, %v637, 0
      %v1121 = vsel %vm212, %v642, 0
      %v1124 = vsel %vm212, %v647, 0
      %v1127 = vsel %vm212, %v652, 0
      %v1130 = vsel %vm212, %v657, 0
      %v1133 = vsel %vm212, %v662, 0
      %v1136 = vsel %vm212, %v667, 0
      %v1139 = vsel %vm212, %v672, 0
      %v1142 = vsel %vm212, %v677, 0
      %v1145 = vsel %vm212, %v682, 0
      %v1148 = vsel %vm212, %v687, 0
      %v1151 = vsel %vm212, %v692, 0
      %v1154 = vsel %vm212, %v697, 0
      %v1157 = vsel %vm212, %v702, 0
      %v1160 = vsel %vm212, %v707, 0
      %v1163 = vsel %vm212, %v712, 0
      %v1166 = vsel %vm212, %v717, 0
      %v1169 = vsel %vm212, %v722, 0
      %v1172 = vsel %vm212, %v727, 0
      %v1175 = vsel %vm212, %v732, 0
      %v1178 = vsel %vm212, %v737, 0
      %v1181 = vsel %vm212, %v742, 0
      %v1184 = vsel %vm212, %v747, 0
      %v1187 = vsel %vm212, %v752, 0
      %v1190 = vsel %vm212, %v757, 0
      %v1193 = vsel %vm212, %v762, 0
      %v1196 = vsel %vm212, %v767, 0
      %1198 = vmatprep.subr.mxu0 0.0
      %1199 = vmatpush1.xpose.msra.mxu0 %v1103
      %1200 = vmatprep.subr.mxu0 0.0
      %1201 = vmatpush1.xpose.msra.mxu0 %v1106
      %1202 = vmatprep.subr.mxu0 0.0
      %1203 = vmatpush1.xpose.msra.mxu0 %v1109
      %1204 = vmatprep.subr.mxu0 0.0
      %1205 = vmatpush1.xpose.msra.mxu0 %v1112
      %1206 = vmatprep.subr.mxu0 0.0
      %1207 = vmatpush1.xpose.msra.mxu0 %v1115
      %1208 = vmatprep.subr.mxu0 0.0
      %1209 = vmatpush1.xpose.msra.mxu0 %v1118
      %1210 = vmatprep.subr.mxu0 0.0
      %1211 = vmatpush1.xpose.msra.mxu0 %v1121
      %1212 = vmatprep.subr.mxu0 0.0
      %1213 = vmatpush1.xpose.msra.mxu0 %v1124
      %1214 = vmatprep.subr.mxu0 0.0
      %1215 = vmatpush1.xpose.msra.mxu0 %v1127
      %1216 = vmatprep.subr.mxu0 0.0
      %1217 = vmatpush1.xpose.msra.mxu0 %v1130
      %1218 = vmatprep.subr.mxu0 0.0
      %1219 = vmatpush1.xpose.msra.mxu0 %v1133
      %1220 = vmatprep.subr.mxu0 0.0
      %1221 = vmatpush1.xpose.msra.mxu0 %v1136
      %1222 = vmatprep.subr.mxu0 0.0
      %1223 = vmatpush1.xpose.msra.mxu0 %v1139
      %1224 = vmatprep.subr.mxu0 0.0
      %1225 = vmatpush1.xpose.msra.mxu0 %v1142
      %1226 = vmatprep.subr.mxu0 0.0
      %1227 = vmatpush1.xpose.msra.mxu0 %v1145
      %1228 = vmatprep.subr.mxu0 0.0
      %1229 = vmatpush1.xpose.msra.mxu0 %v1148
      %1230 = vmatprep.subr.mxu0 0.0
      %1231 = vmatpush1.xpose.msra.mxu0 %v1151
      %1232 = vmatprep.subr.mxu0 0.0
      %1233 = vmatpush1.xpose.msra.mxu0 %v1154
      %1234 = vmatprep.subr.mxu0 0.0
      %1235 = vmatpush1.xpose.msra.mxu0 %v1157
      %1236 = vmatprep.subr.mxu0 0.0
      %1237 = vmatpush1.xpose.msra.mxu0 %v1160
      %1238 = vmatprep.subr.mxu0 0.0
      %1239 = vmatpush1.xpose.msra.mxu0 %v1163
      %1240 = vmatprep.subr.mxu0 0.0
      %1241 = vmatpush1.xpose.msra.mxu0 %v1166
      %1242 = vmatprep.subr.mxu0 0.0
      %1243 = vmatpush1.xpose.msra.mxu0 %v1169
      %1244 = vmatprep.subr.mxu0 0.0
      %1245 = vmatpush1.xpose.msra.mxu0 %v1172
      %1246 = vmatprep.subr.mxu0 0.0
      %1247 = vmatpush1.xpose.msra.mxu0 %v1175
      %1248 = vmatprep.subr.mxu0 0.0
      %1249 = vmatpush1.xpose.msra.mxu0 %v1178
      %1250 = vmatprep.subr.mxu0 0.0
      %1251 = vmatpush1.xpose.msra.mxu0 %v1181
      %1252 = vmatprep.subr.mxu0 0.0
      %1253 = vmatpush1.xpose.msra.mxu0 %v1184
      %1254 = vmatprep.subr.mxu0 0.0
      %1255 = vmatpush1.xpose.msra.mxu0 %v1187
      %1256 = vmatprep.subr.mxu0 0.0
      %1257 = vmatpush1.xpose.msra.mxu0 %v1190
      %1258 = vmatprep.subr.mxu0 0.0
      %1259 = vmatpush1.xpose.msra.mxu0 %v1193
      %1260 = vmatprep.subr.mxu0 0.0
      %1261 = vmatpush1.xpose.msra.mxu0 %v1196
      %1262 = vmatprep.mubr.f32.mxu0 0.0
      %1263 = vmatmul.mubr.f32.gmra.mrb[0].mxu0 %v1007
      %v1264 = vpop.f32.mrb[0].mxu0
      %v1265 = vadd.f32 0.0, %v1264
      %v1266 = vpop.f32.mrb[0].mxu0
      %v1267 = vadd.f32 0.0, %v1266
      %1268 = vmatprep.mubr.f32.mxu0 0.0
      %1269 = vmatmul.mubr.f32.gmra.mrb[0].mxu0 %v1010
      %v1270 = vpop.f32.mrb[0].mxu0
      %v1271 = vadd.f32 0.0, %v1270
      %v1272 = vpop.f32.mrb[0].mxu0
      %v1273 = vadd.f32 0.0, %v1272
      %1274 = vmatprep.mubr.f32.mxu0 0.0
      %1275 = vmatmul.mubr.f32.gmra.mrb[0].mxu0 %v1013
      %v1276 = vpop.f32.mrb[0].mxu0
      %v1277 = vadd.f32 0.0, %v1276
      %v1278 = vpop.f32.mrb[0].mxu0
      %v1279 = vadd.f32 0.0, %v1278
      %1280 = vmatprep.mubr.f32.mxu0 0.0
      %1281 = vmatmul.mubr.f32.gmra.mrb[0].mxu0 %v1016
      %v1282 = vpop.f32.mrb[0].mxu0
      %v1283 = vadd.f32 0.0, %v1282
      %v1284 = vpop.f32.mrb[0].mxu0
      %v1285 = vadd.f32 0.0, %v1284
      %1286 = vmatprep.mubr.f32.mxu0 0.0
      %1287 = vmatmul.mubr.f32.gmra.mrb[0].mxu0 %v1019
      %v1288 = vpop.f32.mrb[0].mxu0
      %v1289 = vadd.f32 0.0, %v1288
      %v1290 = vpop.f32.mrb[0].mxu0
      %v1291 = vadd.f32 0.0, %v1290
      %1292 = vmatprep.mubr.f32.mxu0 0.0
      %1293 = vmatmul.mubr.f32.gmra.mrb[0].mxu0 %v1022
      %v1294 = vpop.f32.mrb[0].mxu0
      %v1295 = vadd.f32 0.0, %v1294
      %v1296 = vpop.f32.mrb[0].mxu0
      %v1297 = vadd.f32 0.0, %v1296
      %1298 = vmatprep.mubr.f32.mxu0 0.0
      %1299 = vmatmul.mubr.f32.gmra.mrb[0].mxu0 %v1025
      %v1300 = vpop.f32.mrb[0].mxu0
      %v1301 = vadd.f32 0.0, %v1300
      %v1302 = vpop.f32.mrb[0].mxu0
      %v1303 = vadd.f32 0.0, %v1302
      %1304 = vmatprep.mubr.f32.mxu0 0.0
      %1305 = vmatmul.mubr.f32.gmra.mrb[0].mxu0 %v1028
      %v1306 = vpop.f32.mrb[0].mxu0
      %v1307 = vadd.f32 0.0, %v1306
      %v1308 = vpop.f32.mrb[0].mxu0
      %v1309 = vadd.f32 0.0, %v1308
      %1310 = vmatprep.mubr.f32.mxu0 0.0
      %1311 = vmatmul.mubr.f32.gmra.mrb[0].mxu0 %v1031
      %v1312 = vpop.f32.mrb[0].mxu0
      %v1313 = vadd.f32 0.0, %v1312
      %v1314 = vpop.f32.mrb[0].mxu0
      %v1315 = vadd.f32 0.0, %v1314
      %1316 = vmatprep.mubr.f32.mxu0 0.0
      %1317 = vmatmul.mubr.f32.gmra.mrb[0].mxu0 %v1034
      %v1318 = vpop.f32.mrb[0].mxu0
      %v1319 = vadd.f32 0.0, %v1318
      %v1320 = vpop.f32.mrb[0].mxu0
      %v1321 = vadd.f32 0.0, %v1320
      %1322 = vmatprep.mubr.f32.mxu0 0.0
      %1323 = vmatmul.mubr.f32.gmra.mrb[0].mxu0 %v1037
      %v1324 = vpop.f32.mrb[0].mxu0
      %v1325 = vadd.f32 0.0, %v1324
      %v1326 = vpop.f32.mrb[0].mxu0
      %v1327 = vadd.f32 0.0, %v1326
      %1328 = vmatprep.mubr.f32.mxu0 0.0
      %1329 = vmatmul.mubr.f32.gmra.mrb[0].mxu0 %v1040
      %v1330 = vpop.f32.mrb[0].mxu0
      %v1331 = vadd.f32 0.0, %v1330
      %v1332 = vpop.f32.mrb[0].mxu0
      %v1333 = vadd.f32 0.0, %v1332
      %1334 = vmatprep.mubr.f32.mxu0 0.0
      %1335 = vmatmul.mubr.f32.gmra.mrb[0].mxu0 %v1043
      %v1336 = vpop.f32.mrb[0].mxu0
      %v1337 = vadd.f32 0.0, %v1336
      %v1338 = vpop.f32.mrb[0].mxu0
      %v1339 = vadd.f32 0.0, %v1338
      %1340 = vmatprep.mubr.f32.mxu0 0.0
      %1341 = vmatmul.mubr.f32.gmra.mrb[0].mxu0 %v1046
      %v1342 = vpop.f32.mrb[0].mxu0
      %v1343 = vadd.f32 0.0, %v1342
      %v1344 = vpop.f32.mrb[0].mxu0
      %v1345 = vadd.f32 0.0, %v1344
      %1346 = vmatprep.mubr.f32.mxu0 0.0
      %1347 = vmatmul.mubr.f32.gmra.mrb[0].mxu0 %v1049
      %v1348 = vpop.f32.mrb[0].mxu0
      %v1349 = vadd.f32 0.0, %v1348
      %v1350 = vpop.f32.mrb[0].mxu0
      %v1351 = vadd.f32 0.0, %v1350
      %1352 = vmatprep.mubr.f32.mxu0 0.0
      %1353 = vmatmul.mubr.f32.gmra.mrb[0].mxu0 %v1052
      %v1354 = vpop.f32.mrb[0].mxu0
      %v1355 = vadd.f32 0.0, %v1354
      %v1356 = vpop.f32.mrb[0].mxu0
      %v1357 = vadd.f32 0.0, %v1356
      %1358 = vmatprep.mubr.f32.mxu0 0.0
      %1359 = vmatmul.mubr.f32.gmra.mrb[0].mxu0 %v1055
      %v1360 = vpop.f32.mrb[0].mxu0
      %v1361 = vadd.f32 0.0, %v1360
      %v1362 = vpop.f32.mrb[0].mxu0
      %v1363 = vadd.f32 0.0, %v1362
      %1364 = vmatprep.mubr.f32.mxu0 0.0
      %1365 = vmatmul.mubr.f32.gmra.mrb[0].mxu0 %v1058
      %v1366 = vpop.f32.mrb[0].mxu0
      %v1367 = vadd.f32 0.0, %v1366
      %v1368 = vpop.f32.mrb[0].mxu0
      %v1369 = vadd.f32 0.0, %v1368
      %1370 = vmatprep.mubr.f32.mxu0 0.0
      %1371 = vmatmul.mubr.f32.gmra.mrb[0].mxu0 %v1061
      %v1372 = vpop.f32.mrb[0].mxu0
      %v1373 = vadd.f32 0.0, %v1372
      %v1374 = vpop.f32.mrb[0].mxu0
      %v1375 = vadd.f32 0.0, %v1374
      %1376 = vmatprep.mubr.f32.mxu0 0.0
      %1377 = vmatmul.mubr.f32.gmra.mrb[0].mxu0 %v1064
      %v1378 = vpop.f32.mrb[0].mxu0
      %v1379 = vadd.f32 0.0, %v1378
      %v1380 = vpop.f32.mrb[0].mxu0
      %v1381 = vadd.f32 0.0, %v1380
      %1382 = vmatprep.mubr.f32.mxu0 0.0
      %1383 = vmatmul.mubr.f32.gmra.mrb[0].mxu0 %v1067
      %v1384 = vpop.f32.mrb[0].mxu0
      %v1385 = vadd.f32 0.0, %v1384
      %v1386 = vpop.f32.mrb[0].mxu0
      %v1387 = vadd.f32 0.0, %v1386
      %1388 = vmatprep.mubr.f32.mxu0 0.0
      %1389 = vmatmul.mubr.f32.gmra.mrb[0].mxu0 %v1070
      %v1390 = vpop.f32.mrb[0].mxu0
      %v1391 = vadd.f32 0.0, %v1390
      %v1392 = vpop.f32.mrb[0].mxu0
      %v1393 = vadd.f32 0.0, %v1392
      %1394 = vmatprep.mubr.f32.mxu0 0.0
      %1395 = vmatmul.mubr.f32.gmra.mrb[0].mxu0 %v1073
      %v1396 = vpop.f32.mrb[0].mxu0
      %v1397 = vadd.f32 0.0, %v1396
      %v1398 = vpop.f32.mrb[0].mxu0
      %v1399 = vadd.f32 0.0, %v1398
      %1400 = vmatprep.mubr.f32.mxu0 0.0
      %1401 = vmatmul.mubr.f32.gmra.mrb[0].mxu0 %v1076
      %v1402 = vpop.f32.mrb[0].mxu0
      %v1403 = vadd.f32 0.0, %v1402
      %v1404 = vpop.f32.mrb[0].mxu0
      %v1405 = vadd.f32 0.0, %v1404
      %1406 = vmatprep.mubr.f32.mxu0 0.0
      %1407 = vmatmul.mubr.f32.gmra.mrb[0].mxu0 %v1079
      %v1408 = vpop.f32.mrb[0].mxu0
      %v1409 = vadd.f32 0.0, %v1408
      %v1410 = vpop.f32.mrb[0].mxu0
      %v1411 = vadd.f32 0.0, %v1410
      %1412 = vmatprep.mubr.f32.mxu0 0.0
      %1413 = vmatmul.mubr.f32.gmra.mrb[0].mxu0 %v1082
      %v1414 = vpop.f32.mrb[0].mxu0
      %v1415 = vadd.f32 0.0, %v1414
      %v1416 = vpop.f32.mrb[0].mxu0
      %v1417 = vadd.f32 0.0, %v1416
      %1418 = vmatprep.mubr.f32.mxu0 0.0
      %1419 = vmatmul.mubr.f32.gmra.mrb[0].mxu0 %v1085
      %v1420 = vpop.f32.mrb[0].mxu0
      %v1421 = vadd.f32 0.0, %v1420
      %v1422 = vpop.f32.mrb[0].mxu0
      %v1423 = vadd.f32 0.0, %v1422
      %1424 = vmatprep.mubr.f32.mxu0 0.0
      %1425 = vmatmul.mubr.f32.gmra.mrb[0].mxu0 %v1088
      %v1426 = vpop.f32.mrb[0].mxu0
      %v1427 = vadd.f32 0.0, %v1426
      %v1428 = vpop.f32.mrb[0].mxu0
      %v1429 = vadd.f32 0.0, %v1428
      %1430 = vmatprep.mubr.f32.mxu0 0.0
      %1431 = vmatmul.mubr.f32.gmra.mrb[0].mxu0 %v1091
      %v1432 = vpop.f32.mrb[0].mxu0
      %v1433 = vadd.f32 0.0, %v1432
      %v1434 = vpop.f32.mrb[0].mxu0
      %v1435 = vadd.f32 0.0, %v1434
      %1436 = vmatprep.mubr.f32.mxu0 0.0
      %1437 = vmatmul.mubr.f32.gmra.mrb[0].mxu0 %v1094
      %v1438 = vpop.f32.mrb[0].mxu0
      %v1439 = vadd.f32 0.0, %v1438
      %v1440 = vpop.f32.mrb[0].mxu0
      %v1441 = vadd.f32 0.0, %v1440
      %1442 = vmatprep.mubr.f32.mxu0 0.0
      %1443 = vmatmul.mubr.f32.gmra.mrb[0].mxu0 %v1097
      %v1444 = vpop.f32.mrb[0].mxu0
      %v1445 = vadd.f32 0.0, %v1444
      %v1446 = vpop.f32.mrb[0].mxu0
      %v1447 = vadd.f32 0.0, %v1446
      %1448 = vmatprep.mubr.f32.mxu0 0.0
      %1449 = vmatmul.mubr.f32.gmra.mrb[0].mxu0 %v1100
      %v1450 = vpop.f32.mrb[0].mxu0
      %v1451 = vadd.f32 0.0, %v1450
      %v1452 = vpop.f32.mrb[0].mxu0
      %v1453 = vadd.f32 0.0, %v1452
      %1454 = vdwg.mxu0
      %v1455 = vmax.f32 %v1265, %v1267
      %1456 = vmax.xlane.f32.xlu0 %v1455
      %v1457 = vpop.xlane.xlu0 %1456
      %v1458 = vmax.f32 %v1271, %v1273
      %1459 = vmax.xlane.f32.xlu0 %v1458
      %v1460 = vpop.xlane.xlu0 %1459
      %v1461 = vmax.f32 %v1277, %v1279
      %1462 = vmax.xlane.f32.xlu0 %v1461
      %v1463 = vpop.xlane.xlu0 %1462
      %v1464 = vmax.f32 %v1283, %v1285
      %1465 = vmax.xlane.f32.xlu0 %v1464
      %v1466 = vpop.xlane.xlu0 %1465
      %v1467 = vmax.f32 %v1289, %v1291
      %1468 = vmax.xlane.f32.xlu0 %v1467
      %v1469 = vpop.xlane.xlu0 %1468
      %v1470 = vmax.f32 %v1295, %v1297
      %1471 = vmax.xlane.f32.xlu0 %v1470
      %v1472 = vpop.xlane.xlu0 %1471
      %v1473 = vmax.f32 %v1301, %v1303
      %1474 = vmax.xlane.f32.xlu0 %v1473
      %v1475 = vpop.xlane.xlu0 %1474
      %v1476 = vmax.f32 %v1307, %v1309
      %1477 = vmax.xlane.f32.xlu0 %v1476
      %v1478 = vpop.xlane.xlu0 %1477
      %v1479 = vmax.f32 %v1313, %v1315
      %1480 = vmax.xlane.f32.xlu0 %v1479
      %v1481 = vpop.xlane.xlu0 %1480
      %v1482 = vmax.f32 %v1319, %v1321
      %1483 = vmax.xlane.f32.xlu0 %v1482
      %v1484 = vpop.xlane.xlu0 %1483
      %v1485 = vmax.f32 %v1325, %v1327
      %1486 = vmax.xlane.f32.xlu0 %v1485
      %v1487 = vpop.xlane.xlu0 %1486
      %v1488 = vmax.f32 %v1331, %v1333
      %1489 = vmax.xlane.f32.xlu0 %v1488
      %v1490 = vpop.xlane.xlu0 %1489
      %v1491 = vmax.f32 %v1337, %v1339
      %1492 = vmax.xlane.f32.xlu0 %v1491
      %v1493 = vpop.xlane.xlu0 %1492
      %v1494 = vmax.f32 %v1343, %v1345
      %1495 = vmax.xlane.f32.xlu0 %v1494
      %v1496 = vpop.xlane.xlu0 %1495
      %v1497 = vmax.f32 %v1349, %v1351
      %1498 = vmax.xlane.f32.xlu0 %v1497
      %v1499 = vpop.xlane.xlu0 %1498
      %v1500 = vmax.f32 %v1355, %v1357
      %1501 = vmax.xlane.f32.xlu0 %v1500
      %v1502 = vpop.xlane.xlu0 %1501
      %v1503 = vmax.f32 %v1361, %v1363
      %1504 = vmax.xlane.f32.xlu0 %v1503
      %v1505 = vpop.xlane.xlu0 %1504
      %v1506 = vmax.f32 %v1367, %v1369
      %1507 = vmax.xlane.f32.xlu0 %v1506
      %v1508 = vpop.xlane.xlu0 %1507
      %v1509 = vmax.f32 %v1373, %v1375
      %1510 = vmax.xlane.f32.xlu0 %v1509
      %v1511 = vpop.xlane.xlu0 %1510
      %v1512 = vmax.f32 %v1379, %v1381
      %1513 = vmax.xlane.f32.xlu0 %v1512
      %v1514 = vpop.xlane.xlu0 %1513
      %v1515 = vmax.f32 %v1385, %v1387
      %1516 = vmax.xlane.f32.xlu0 %v1515
      %v1517 = vpop.xlane.xlu0 %1516
      %v1518 = vmax.f32 %v1391, %v1393
      %1519 = vmax.xlane.f32.xlu0 %v1518
      %v1520 = vpop.xlane.xlu0 %1519
      %v1521 = vmax.f32 %v1397, %v1399
      %1522 = vmax.xlane.f32.xlu0 %v1521
      %v1523 = vpop.xlane.xlu0 %1522
      %v1524 = vmax.f32 %v1403, %v1405
      %1525 = vmax.xlane.f32.xlu0 %v1524
      %v1526 = vpop.xlane.xlu0 %1525
      %v1527 = vmax.f32 %v1409, %v1411
      %1528 = vmax.xlane.f32.xlu0 %v1527
      %v1529 = vpop.xlane.xlu0 %1528
      %v1530 = vmax.f32 %v1415, %v1417
      %1531 = vmax.xlane.f32.xlu0 %v1530
      %v1532 = vpop.xlane.xlu0 %1531
      %v1533 = vmax.f32 %v1421, %v1423
      %1534 = vmax.xlane.f32.xlu0 %v1533
      %v1535 = vpop.xlane.xlu0 %1534
      %v1536 = vmax.f32 %v1427, %v1429
      %1537 = vmax.xlane.f32.xlu0 %v1536
      %v1538 = vpop.xlane.xlu0 %1537
      %v1539 = vmax.f32 %v1433, %v1435
      %1540 = vmax.xlane.f32.xlu0 %v1539
      %v1541 = vpop.xlane.xlu0 %1540
      %v1542 = vmax.f32 %v1439, %v1441
      %1543 = vmax.xlane.f32.xlu0 %v1542
      %v1544 = vpop.xlane.xlu0 %1543
      %v1545 = vmax.f32 %v1445, %v1447
      %1546 = vmax.xlane.f32.xlu0 %v1545
      %v1547 = vpop.xlane.xlu0 %1546
      %v1548 = vmax.f32 %v1451, %v1453
      %1549 = vmax.xlane.f32.xlu0 %v1548
      %v1550 = vpop.xlane.xlu0 %1549
      %v1551 = vsub.f32 %v1265, %v1457
      %v1552 = vsub.f32 %v1267, %v1457
      %v1553 = vsub.f32 %v1271, %v1460
      %v1554 = vsub.f32 %v1273, %v1460
      %v1555 = vsub.f32 %v1277, %v1463
      %v1556 = vsub.f32 %v1279, %v1463
      %v1557 = vsub.f32 %v1283, %v1466
      %v1558 = vsub.f32 %v1285, %v1466
      %v1559 = vsub.f32 %v1289, %v1469
      %v1560 = vsub.f32 %v1291, %v1469
      %v1561 = vsub.f32 %v1295, %v1472
      %v1562 = vsub.f32 %v1297, %v1472
      %v1563 = vsub.f32 %v1301, %v1475
      %v1564 = vsub.f32 %v1303, %v1475
      %v1565 = vsub.f32 %v1307, %v1478
      %v1566 = vsub.f32 %v1309, %v1478
      %v1567 = vsub.f32 %v1313, %v1481
      %v1568 = vsub.f32 %v1315, %v1481
      %v1569 = vsub.f32 %v1319, %v1484
      %v1570 = vsub.f32 %v1321, %v1484
      %v1571 = vsub.f32 %v1325, %v1487
      %v1572 = vsub.f32 %v1327, %v1487
      %v1573 = vsub.f32 %v1331, %v1490
      %v1574 = vsub.f32 %v1333, %v1490
      %v1575 = vsub.f32 %v1337, %v1493
      %v1576 = vsub.f32 %v1339, %v1493
      %v1577 = vsub.f32 %v1343, %v1496
      %v1578 = vsub.f32 %v1345, %v1496
      %v1579 = vsub.f32 %v1349, %v1499
      %v1580 = vsub.f32 %v1351, %v1499
      %v1581 = vsub.f32 %v1355, %v1502
      %v1582 = vsub.f32 %v1357, %v1502
      %v1583 = vsub.f32 %v1361, %v1505
      %v1584 = vsub.f32 %v1363, %v1505
      %v1585 = vsub.f32 %v1367, %v1508
      %v1586 = vsub.f32 %v1369, %v1508
      %v1587 = vsub.f32 %v1373, %v1511
      %v1588 = vsub.f32 %v1375, %v1511
      %v1589 = vsub.f32 %v1379, %v1514
      %v1590 = vsub.f32 %v1381, %v1514
      %v1591 = vsub.f32 %v1385, %v1517
      %v1592 = vsub.f32 %v1387, %v1517
      %v1593 = vsub.f32 %v1391, %v1520
      %v1594 = vsub.f32 %v1393, %v1520
      %v1595 = vsub.f32 %v1397, %v1523
      %v1596 = vsub.f32 %v1399, %v1523
      %v1597 = vsub.f32 %v1403, %v1526
      %v1598 = vsub.f32 %v1405, %v1526
      %v1599 = vsub.f32 %v1409, %v1529
      %v1600 = vsub.f32 %v1411, %v1529
      %v1601 = vsub.f32 %v1415, %v1532
      %v1602 = vsub.f32 %v1417, %v1532
      %v1603 = vsub.f32 %v1421, %v1535
      %v1604 = vsub.f32 %v1423, %v1535
      %v1605 = vsub.f32 %v1427, %v1538
      %v1606 = vsub.f32 %v1429, %v1538
      %v1607 = vsub.f32 %v1433, %v1541
      %v1608 = vsub.f32 %v1435, %v1541
      %v1609 = vsub.f32 %v1439, %v1544
      %v1610 = vsub.f32 %v1441, %v1544
      %v1611 = vsub.f32 %v1445, %v1547
      %v1612 = vsub.f32 %v1447, %v1547
      %v1613 = vsub.f32 %v1451, %v1550
      %v1614 = vsub.f32 %v1453, %v1550
      %v1615 = vmul.f32 %v1551, 1.442695
      %v1616 = vpow.pop %v1615
      %v1617 = vmul.f32 %v1552, 1.442695
      %v1618 = vpow.pop %v1617
      %v1619 = vmul.f32 %v1553, 1.442695
      %v1620 = vpow.pop %v1619
      %v1621 = vmul.f32 %v1554, 1.442695
      %v1622 = vpow.pop %v1621
      %v1623 = vmul.f32 %v1555, 1.442695
      %v1624 = vpow.pop %v1623
      %v1625 = vmul.f32 %v1556, 1.442695
      %v1626 = vpow.pop %v1625
      %v1627 = vmul.f32 %v1557, 1.442695
      %v1628 = vpow.pop %v1627
      %v1629 = vmul.f32 %v1558, 1.442695
      %v1630 = vpow.pop %v1629
      %v1631 = vmul.f32 %v1559, 1.442695
      %v1632 = vpow.pop %v1631
      %v1633 = vmul.f32 %v1560, 1.442695
      %v1634 = vpow.pop %v1633
      %v1635 = vmul.f32 %v1561, 1.442695
      %v1636 = vpow.pop %v1635
      %v1637 = vmul.f32 %v1562, 1.442695
      %v1638 = vpow.pop %v1637
      %v1639 = vmul.f32 %v1563, 1.442695
      %v1640 = vpow.pop %v1639
      %v1641 = vmul.f32 %v1564, 1.442695
      %v1642 = vpow.pop %v1641
      %v1643 = vmul.f32 %v1565, 1.442695
      %v1644 = vpow.pop %v1643
      %v1645 = vmul.f32 %v1566, 1.442695
      %v1646 = vpow.pop %v1645
      %v1647 = vmul.f32 %v1567, 1.442695
      %v1648 = vpow.pop %v1647
      %v1649 = vmul.f32 %v1568, 1.442695
      %v1650 = vpow.pop %v1649
      %v1651 = vmul.f32 %v1569, 1.442695
      %v1652 = vpow.pop %v1651
      %v1653 = vmul.f32 %v1570, 1.442695
      %v1654 = vpow.pop %v1653
      %v1655 = vmul.f32 %v1571, 1.442695
      %v1656 = vpow.pop %v1655
      %v1657 = vmul.f32 %v1572, 1.442695
      %v1658 = vpow.pop %v1657
      %v1659 = vmul.f32 %v1573, 1.442695
      %v1660 = vpow.pop %v1659
      %v1661 = vmul.f32 %v1574, 1.442695
      %v1662 = vpow.pop %v1661
      %v1663 = vmul.f32 %v1575, 1.442695
      %v1664 = vpow.pop %v1663
      %v1665 = vmul.f32 %v1576, 1.442695
      %v1666 = vpow.pop %v1665
      %v1667 = vmul.f32 %v1577, 1.442695
      %v1668 = vpow.pop %v1667
      %v1669 = vmul.f32 %v1578, 1.442695
      %v1670 = vpow.pop %v1669
      %v1671 = vmul.f32 %v1579, 1.442695
      %v1672 = vpow.pop %v1671
      %v1673 = vmul.f32 %v1580, 1.442695
      %v1674 = vpow.pop %v1673
      %v1675 = vmul.f32 %v1581, 1.442695
      %v1676 = vpow.pop %v1675
      %v1677 = vmul.f32 %v1582, 1.442695
      %v1678 = vpow.pop %v1677
      %v1679 = vmul.f32 %v1583, 1.442695
      %v1680 = vpow.pop %v1679
      %v1681 = vmul.f32 %v1584, 1.442695
      %v1682 = vpow.pop %v1681
      %v1683 = vmul.f32 %v1585, 1.442695
      %v1684 = vpow.pop %v1683
      %v1685 = vmul.f32 %v1586, 1.442695
      %v1686 = vpow.pop %v1685
      %v1687 = vmul.f32 %v1587, 1.442695
      %v1688 = vpow.pop %v1687
      %v1689 = vmul.f32 %v1588, 1.442695
      %v1690 = vpow.pop %v1689
      %v1691 = vmul.f32 %v1589, 1.442695
      %v1692 = vpow.pop %v1691
      %v1693 = vmul.f32 %v1590, 1.442695
      %v1694 = vpow.pop %v1693
      %v1695 = vmul.f32 %v1591, 1.442695
      %v1696 = vpow.pop %v1695
      %v1697 = vmul.f32 %v1592, 1.442695
      %v1698 = vpow.pop %v1697
      %v1699 = vmul.f32 %v1593, 1.442695
      %v1700 = vpow.pop %v1699
      %v1701 = vmul.f32 %v1594, 1.442695
      %v1702 = vpow.pop %v1701
      %v1703 = vmul.f32 %v1595, 1.442695
      %v1704 = vpow.pop %v1703
      %v1705 = vmul.f32 %v1596, 1.442695
      %v1706 = vpow.pop %v1705
      %v1707 = vmul.f32 %v1597, 1.442695
      %v1708 = vpow.pop %v1707
      %v1709 = vmul.f32 %v1598, 1.442695
      %v1710 = vpow.pop %v1709
      %v1711 = vmul.f32 %v1599, 1.442695
      %v1712 = vpow.pop %v1711
      %v1713 = vmul.f32 %v1600, 1.442695
      %v1714 = vpow.pop %v1713
      %v1715 = vmul.f32 %v1601, 1.442695
      %v1716 = vpow.pop %v1715
      %v1717 = vmul.f32 %v1602, 1.442695
      %v1718 = vpow.pop %v1717
      %v1719 = vmul.f32 %v1603, 1.442695
      %v1720 = vpow.pop %v1719
      %v1721 = vmul.f32 %v1604, 1.442695
      %v1722 = vpow.pop %v1721
      %v1723 = vmul.f32 %v1605, 1.442695
      %v1724 = vpow.pop %v1723
      %v1725 = vmul.f32 %v1606, 1.442695
      %v1726 = vpow.pop %v1725
      %v1727 = vmul.f32 %v1607, 1.442695
      %v1728 = vpow.pop %v1727
      %v1729 = vmul.f32 %v1608, 1.442695
      %v1730 = vpow.pop %v1729
      %v1731 = vmul.f32 %v1609, 1.442695
      %v1732 = vpow.pop %v1731
      %v1733 = vmul.f32 %v1610, 1.442695
      %v1734 = vpow.pop %v1733
      %v1735 = vmul.f32 %v1611, 1.442695
      %v1736 = vpow.pop %v1735
      %v1737 = vmul.f32 %v1612, 1.442695
      %v1738 = vpow.pop %v1737
      %v1739 = vmul.f32 %v1613, 1.442695
      %v1740 = vpow.pop %v1739
      %v1741 = vmul.f32 %v1614, 1.442695
      %v1742 = vpow.pop %v1741
      %v1743 = vadd.f32 %v1616, %v1618
      %1744 = vadd.xlane.f32.xlu0 %v1743
      %v1745 = vpop.xlane.xlu0 %1744
      %v1746 = vadd.f32 %v1620, %v1622
      %1747 = vadd.xlane.f32.xlu0 %v1746
      %v1748 = vpop.xlane.xlu0 %1747
      %v1749 = vadd.f32 %v1624, %v1626
      %1750 = vadd.xlane.f32.xlu0 %v1749
      %v1751 = vpop.xlane.xlu0 %1750
      %v1752 = vadd.f32 %v1628, %v1630
      %1753 = vadd.xlane.f32.xlu0 %v1752
      %v1754 = vpop.xlane.xlu0 %1753
      %v1755 = vadd.f32 %v1632, %v1634
      %1756 = vadd.xlane.f32.xlu0 %v1755
      %v1757 = vpop.xlane.xlu0 %1756
      %v1758 = vadd.f32 %v1636, %v1638
      %1759 = vadd.xlane.f32.xlu0 %v1758
      %v1760 = vpop.xlane.xlu0 %1759
      %v1761 = vadd.f32 %v1640, %v1642
      %1762 = vadd.xlane.f32.xlu0 %v1761
      %v1763 = vpop.xlane.xlu0 %1762
      %v1764 = vadd.f32 %v1644, %v1646
      %1765 = vadd.xlane.f32.xlu0 %v1764
      %v1766 = vpop.xlane.xlu0 %1765
      %v1767 = vadd.f32 %v1648, %v1650
      %1768 = vadd.xlane.f32.xlu0 %v1767
      %v1769 = vpop.xlane.xlu0 %1768
      %v1770 = vadd.f32 %v1652, %v1654
      %1771 = vadd.xlane.f32.xlu0 %v1770
      %v1772 = vpop.xlane.xlu0 %1771
      %v1773 = vadd.f32 %v1656, %v1658
      %1774 = vadd.xlane.f32.xlu0 %v1773
      %v1775 = vpop.xlane.xlu0 %1774
      %v1776 = vadd.f32 %v1660, %v1662
      %1777 = vadd.xlane.f32.xlu0 %v1776
      %v1778 = vpop.xlane.xlu0 %1777
      %v1779 = vadd.f32 %v1664, %v1666
      %1780 = vadd.xlane.f32.xlu0 %v1779
      %v1781 = vpop.xlane.xlu0 %1780
      %v1782 = vadd.f32 %v1668, %v1670
      %1783 = vadd.xlane.f32.xlu0 %v1782
      %v1784 = vpop.xlane.xlu0 %1783
      %v1785 = vadd.f32 %v1672, %v1674
      %1786 = vadd.xlane.f32.xlu0 %v1785
      %v1787 = vpop.xlane.xlu0 %1786
      %v1788 = vadd.f32 %v1676, %v1678
      %1789 = vadd.xlane.f32.xlu0 %v1788
      %v1790 = vpop.xlane.xlu0 %1789
      %v1791 = vadd.f32 %v1680, %v1682
      %1792 = vadd.xlane.f32.xlu0 %v1791
      %v1793 = vpop.xlane.xlu0 %1792
      %v1794 = vadd.f32 %v1684, %v1686
      %1795 = vadd.xlane.f32.xlu0 %v1794
      %v1796 = vpop.xlane.xlu0 %1795
      %v1797 = vadd.f32 %v1688, %v1690
      %1798 = vadd.xlane.f32.xlu0 %v1797
      %v1799 = vpop.xlane.xlu0 %1798
      %v1800 = vadd.f32 %v1692, %v1694
      %1801 = vadd.xlane.f32.xlu0 %v1800
      %v1802 = vpop.xlane.xlu0 %1801
      %v1803 = vadd.f32 %v1696, %v1698
      %1804 = vadd.xlane.f32.xlu0 %v1803
      %v1805 = vpop.xlane.xlu0 %1804
      %v1806 = vadd.f32 %v1700, %v1702
      %1807 = vadd.xlane.f32.xlu0 %v1806
      %v1808 = vpop.xlane.xlu0 %1807
      %v1809 = vadd.f32 %v1704, %v1706
      %1810 = vadd.xlane.f32.xlu0 %v1809
      %v1811 = vpop.xlane.xlu0 %1810
      %v1812 = vadd.f32 %v1708, %v1710
      %1813 = vadd.xlane.f32.xlu0 %v1812
      %v1814 = vpop.xlane.xlu0 %1813
      %v1815 = vadd.f32 %v1712, %v1714
      %1816 = vadd.xlane.f32.xlu0 %v1815
      %v1817 = vpop.xlane.xlu0 %1816
      %v1818 = vadd.f32 %v1716, %v1718
      %1819 = vadd.xlane.f32.xlu0 %v1818
      %v1820 = vpop.xlane.xlu0 %1819
      %v1821 = vadd.f32 %v1720, %v1722
      %1822 = vadd.xlane.f32.xlu0 %v1821
      %v1823 = vpop.xlane.xlu0 %1822
      %v1824 = vadd.f32 %v1724, %v1726
      %1825 = vadd.xlane.f32.xlu0 %v1824
      %v1826 = vpop.xlane.xlu0 %1825
      %v1827 = vadd.f32 %v1728, %v1730
      %1828 = vadd.xlane.f32.xlu0 %v1827
      %v1829 = vpop.xlane.xlu0 %1828
      %v1830 = vadd.f32 %v1732, %v1734
      %1831 = vadd.xlane.f32.xlu0 %v1830
      %v1832 = vpop.xlane.xlu0 %1831
      %v1833 = vadd.f32 %v1736, %v1738
      %1834 = vadd.xlane.f32.xlu0 %v1833
      %v1835 = vpop.xlane.xlu0 %1834
      %v1836 = vadd.f32 %v1740, %v1742
      %1837 = vadd.xlane.f32.xlu0 %v1836
      %v1838 = vpop.xlane.xlu0 %1837
      %1839 = vmatprep.subr.mxu0 0.0
      %1840 = vmatpush1.msra.mxu0 %v848
      %1841 = vmatprep.subr.mxu0 0.0
      %1842 = vmatpush1.msra.mxu0 %v853
      %1843 = vmatprep.subr.mxu0 0.0
      %1844 = vmatpush1.msra.mxu0 %v858
      %1845 = vmatprep.subr.mxu0 0.0
      %1846 = vmatpush1.msra.mxu0 %v863
      %1847 = vmatprep.subr.mxu0 0.0
      %1848 = vmatpush1.msra.mxu0 %v868
      %1849 = vmatprep.subr.mxu0 0.0
      %1850 = vmatpush1.msra.mxu0 %v873
      %1851 = vmatprep.subr.mxu0 0.0
      %1852 = vmatpush1.msra.mxu0 %v878
      %1853 = vmatprep.subr.mxu0 0.0
      %1854 = vmatpush1.msra.mxu0 %v883
      %1855 = vmatprep.subr.mxu0 0.0
      %1856 = vmatpush1.msra.mxu0 %v888
      %1857 = vmatprep.subr.mxu0 0.0
      %1858 = vmatpush1.msra.mxu0 %v893
      %1859 = vmatprep.subr.mxu0 0.0
      %1860 = vmatpush1.msra.mxu0 %v898
      %1861 = vmatprep.subr.mxu0 0.0
      %1862 = vmatpush1.msra.mxu0 %v903
      %1863 = vmatprep.subr.mxu0 0.0
      %1864 = vmatpush1.msra.mxu0 %v908
      %1865 = vmatprep.subr.mxu0 0.0
      %1866 = vmatpush1.msra.mxu0 %v913
      %1867 = vmatprep.subr.mxu0 0.0
      %1868 = vmatpush1.msra.mxu0 %v918
      %1869 = vmatprep.subr.mxu0 0.0
      %1870 = vmatpush1.msra.mxu0 %v923
      %1871 = vmatprep.subr.mxu0 0.0
      %1872 = vmatpush1.msra.mxu0 %v928
      %1873 = vmatprep.subr.mxu0 0.0
      %1874 = vmatpush1.msra.mxu0 %v933
      %1875 = vmatprep.subr.mxu0 0.0
      %1876 = vmatpush1.msra.mxu0 %v938
      %1877 = vmatprep.subr.mxu0 0.0
      %1878 = vmatpush1.msra.mxu0 %v943
      %1879 = vmatprep.subr.mxu0 0.0
      %1880 = vmatpush1.msra.mxu0 %v948
      %1881 = vmatprep.subr.mxu0 0.0
      %1882 = vmatpush1.msra.mxu0 %v953
      %1883 = vmatprep.subr.mxu0 0.0
      %1884 = vmatpush1.msra.mxu0 %v958
      %1885 = vmatprep.subr.mxu0 0.0
      %1886 = vmatpush1.msra.mxu0 %v963
      %1887 = vmatprep.subr.mxu0 0.0
      %1888 = vmatpush1.msra.mxu0 %v968
      %1889 = vmatprep.subr.mxu0 0.0
      %1890 = vmatpush1.msra.mxu0 %v973
      %1891 = vmatprep.subr.mxu0 0.0
      %1892 = vmatpush1.msra.mxu0 %v978
      %1893 = vmatprep.subr.mxu0 0.0
      %1894 = vmatpush1.msra.mxu0 %v983
      %1895 = vmatprep.subr.mxu0 0.0
      %1896 = vmatpush1.msra.mxu0 %v988
      %1897 = vmatprep.subr.mxu0 0.0
      %1898 = vmatpush1.msra.mxu0 %v993
      %1899 = vmatprep.subr.mxu0 0.0
      %1900 = vmatpush1.msra.mxu0 %v998
      %1901 = vmatprep.subr.mxu0 0.0
      %1902 = vmatpush1.msra.mxu0 %v1003
      %1903 = vmatprep.mubr.f32.mxu0 %v1618
      %1904 = vmatmul.mubr.f32.gmra.mrb[0].mxu0 %v1616
      %v1905 = vpop.f32.mrb[0].mxu0
      %v1906 = vadd.f32 0.0, %v1905
      %v1907 = vpop.f32.mrb[0].mxu0
      %1908 = vmatprep.mubr.f32.mxu0 %v1622
      %1909 = vmatmul.mubr.f32.gmra.mrb[0].mxu0 %v1620
      %v1910 = vpop.f32.mrb[0].mxu0
      %v1911 = vadd.f32 0.0, %v1910
      %v1912 = vpop.f32.mrb[0].mxu0
      %1913 = vmatprep.mubr.f32.mxu0 %v1626
      %1914 = vmatmul.mubr.f32.gmra.mrb[0].mxu0 %v1624
      %v1915 = vpop.f32.mrb[0].mxu0
      %v1916 = vadd.f32 0.0, %v1915
      %v1917 = vpop.f32.mrb[0].mxu0
      %1918 = vmatprep.mubr.f32.mxu0 %v1630
      %1919 = vmatmul.mubr.f32.gmra.mrb[0].mxu0 %v1628
      %v1920 = vpop.f32.mrb[0].mxu0
      %v1921 = vadd.f32 0.0, %v1920
      %v1922 = vpop.f32.mrb[0].mxu0
      %1923 = vmatprep.mubr.f32.mxu0 %v1634
      %1924 = vmatmul.mubr.f32.gmra.mrb[0].mxu0 %v1632
      %v1925 = vpop.f32.mrb[0].mxu0
      %v1926 = vadd.f32 0.0, %v1925
      %v1927 = vpop.f32.mrb[0].mxu0
      %1928 = vmatprep.mubr.f32.mxu0 %v1638
      %1929 = vmatmul.mubr.f32.gmra.mrb[0].mxu0 %v1636
      %v1930 = vpop.f32.mrb[0].mxu0
      %v1931 = vadd.f32 0.0, %v1930
      %v1932 = vpop.f32.mrb[0].mxu0
      %1933 = vmatprep.mubr.f32.mxu0 %v1642
      %1934 = vmatmul.mubr.f32.gmra.mrb[0].mxu0 %v1640
      %v1935 = vpop.f32.mrb[0].mxu0
      %v1936 = vadd.f32 0.0, %v1935
      %v1937 = vpop.f32.mrb[0].mxu0
      %1938 = vmatprep.mubr.f32.mxu0 %v1646
      %1939 = vmatmul.mubr.f32.gmra.mrb[0].mxu0 %v1644
      %v1940 = vpop.f32.mrb[0].mxu0
      %v1941 = vadd.f32 0.0, %v1940
      %v1942 = vpop.f32.mrb[0].mxu0
      %1943 = vmatprep.mubr.f32.mxu0 %v1650
      %1944 = vmatmul.mubr.f32.gmra.mrb[0].mxu0 %v1648
      %v1945 = vpop.f32.mrb[0].mxu0
      %v1946 = vadd.f32 0.0, %v1945
      %v1947 = vpop.f32.mrb[0].mxu0
      %1948 = vmatprep.mubr.f32.mxu0 %v1654
      %1949 = vmatmul.mubr.f32.gmra.mrb[0].mxu0 %v1652
      %v1950 = vpop.f32.mrb[0].mxu0
      %v1951 = vadd.f32 0.0, %v1950
      %v1952 = vpop.f32.mrb[0].mxu0
      %1953 = vmatprep.mubr.f32.mxu0 %v1658
      %1954 = vmatmul.mubr.f32.gmra.mrb[0].mxu0 %v1656
      %v1955 = vpop.f32.mrb[0].mxu0
      %v1956 = vadd.f32 0.0, %v1955
      %v1957 = vpop.f32.mrb[0].mxu0
      %1958 = vmatprep.mubr.f32.mxu0 %v1662
      %1959 = vmatmul.mubr.f32.gmra.mrb[0].mxu0 %v1660
      %v1960 = vpop.f32.mrb[0].mxu0
      %v1961 = vadd.f32 0.0, %v1960
      %v1962 = vpop.f32.mrb[0].mxu0
      %1963 = vmatprep.mubr.f32.mxu0 %v1666
      %1964 = vmatmul.mubr.f32.gmra.mrb[0].mxu0 %v1664
      %v1965 = vpop.f32.mrb[0].mxu0
      %v1966 = vadd.f32 0.0, %v1965
      %v1967 = vpop.f32.mrb[0].mxu0
      %1968 = vmatprep.mubr.f32.mxu0 %v1670
      %1969 = vmatmul.mubr.f32.gmra.mrb[0].mxu0 %v1668
      %v1970 = vpop.f32.mrb[0].mxu0
      %v1971 = vadd.f32 0.0, %v1970
      %v1972 = vpop.f32.mrb[0].mxu0
      %1973 = vmatprep.mubr.f32.mxu0 %v1674
      %1974 = vmatmul.mubr.f32.gmra.mrb[0].mxu0 %v1672
      %v1975 = vpop.f32.mrb[0].mxu0
      %v1976 = vadd.f32 0.0, %v1975
      %v1977 = vpop.f32.mrb[0].mxu0
      %1978 = vmatprep.mubr.f32.mxu0 %v1678
      %1979 = vmatmul.mubr.f32.gmra.mrb[0].mxu0 %v1676
      %v1980 = vpop.f32.mrb[0].mxu0
      %v1981 = vadd.f32 0.0, %v1980
      %v1982 = vpop.f32.mrb[0].mxu0
      %1983 = vmatprep.mubr.f32.mxu0 %v1682
      %1984 = vmatmul.mubr.f32.gmra.mrb[0].mxu0 %v1680
      %v1985 = vpop.f32.mrb[0].mxu0
      %v1986 = vadd.f32 0.0, %v1985
      %v1987 = vpop.f32.mrb[0].mxu0
      %1988 = vmatprep.mubr.f32.mxu0 %v1686
      %1989 = vmatmul.mubr.f32.gmra.mrb[0].mxu0 %v1684
      %v1990 = vpop.f32.mrb[0].mxu0
      %v1991 = vadd.f32 0.0, %v1990
      %v1992 = vpop.f32.mrb[0].mxu0
      %1993 = vmatprep.mubr.f32.mxu0 %v1690
      %1994 = vmatmul.mubr.f32.gmra.mrb[0].mxu0 %v1688
      %v1995 = vpop.f32.mrb[0].mxu0
      %v1996 = vadd.f32 0.0, %v1995
      %v1997 = vpop.f32.mrb[0].mxu0
      %1998 = vmatprep.mubr.f32.mxu0 %v1694
      %1999 = vmatmul.mubr.f32.gmra.mrb[0].mxu0 %v1692
      %v2000 = vpop.f32.mrb[0].mxu0
      %v2001 = vadd.f32 0.0, %v2000
      %v2002 = vpop.f32.mrb[0].mxu0
      %2003 = vmatprep.mubr.f32.mxu0 %v1698
      %2004 = vmatmul.mubr.f32.gmra.mrb[0].mxu0 %v1696
      %v2005 = vpop.f32.mrb[0].mxu0
      %v2006 = vadd.f32 0.0, %v2005
      %v2007 = vpop.f32.mrb[0].mxu0
      %2008 = vmatprep.mubr.f32.mxu0 %v1702
      %2009 = vmatmul.mubr.f32.gmra.mrb[0].mxu0 %v1700
      %v2010 = vpop.f32.mrb[0].mxu0
      %v2011 = vadd.f32 0.0, %v2010
      %v2012 = vpop.f32.mrb[0].mxu0
      %2013 = vmatprep.mubr.f32.mxu0 %v1706
      %2014 = vmatmul.mubr.f32.gmra.mrb[0].mxu0 %v1704
      %v2015 = vpop.f32.mrb[0].mxu0
      %v2016 = vadd.f32 0.0, %v2015
      %v2017 = vpop.f32.mrb[0].mxu0
      %2018 = vmatprep.mubr.f32.mxu0 %v1710
      %2019 = vmatmul.mubr.f32.gmra.mrb[0].mxu0 %v1708
      %v2020 = vpop.f32.mrb[0].mxu0
      %v2021 = vadd.f32 0.0, %v2020
      %v2022 = vpop.f32.mrb[0].mxu0
      %2023 = vmatprep.mubr.f32.mxu0 %v1714
      %2024 = vmatmul.mubr.f32.gmra.mrb[0].mxu0 %v1712
      %v2025 = vpop.f32.mrb[0].mxu0
      %v2026 = vadd.f32 0.0, %v2025
      %v2027 = vpop.f32.mrb[0].mxu0
      %2028 = vmatprep.mubr.f32.mxu0 %v1718
      %2029 = vmatmul.mubr.f32.gmra.mrb[0].mxu0 %v1716
      %v2030 = vpop.f32.mrb[0].mxu0
      %v2031 = vadd.f32 0.0, %v2030
      %v2032 = vpop.f32.mrb[0].mxu0
      %2033 = vmatprep.mubr.f32.mxu0 %v1722
      %2034 = vmatmul.mubr.f32.gmra.mrb[0].mxu0 %v1720
      %v2035 = vpop.f32.mrb[0].mxu0
      %v2036 = vadd.f32 0.0, %v2035
      %v2037 = vpop.f32.mrb[0].mxu0
      %2038 = vmatprep.mubr.f32.mxu0 %v1726
      %2039 = vmatmul.mubr.f32.gmra.mrb[0].mxu0 %v1724
      %v2040 = vpop.f32.mrb[0].mxu0
      %v2041 = vadd.f32 0.0, %v2040
      %v2042 = vpop.f32.mrb[0].mxu0
      %2043 = vmatprep.mubr.f32.mxu0 %v1730
      %2044 = vmatmul.mubr.f32.gmra.mrb[0].mxu0 %v1728
      %v2045 = vpop.f32.mrb[0].mxu0
      %v2046 = vadd.f32 0.0, %v2045
      %v2047 = vpop.f32.mrb[0].mxu0
      %2048 = vmatprep.mubr.f32.mxu0 %v1734
      %2049 = vmatmul.mubr.f32.gmra.mrb[0].mxu0 %v1732
      %v2050 = vpop.f32.mrb[0].mxu0
      %v2051 = vadd.f32 0.0, %v2050
      %v2052 = vpop.f32.mrb[0].mxu0
      %2053 = vmatprep.mubr.f32.mxu0 %v1738
      %2054 = vmatmul.mubr.f32.gmra.mrb[0].mxu0 %v1736
      %v2055 = vpop.f32.mrb[0].mxu0
      %v2056 = vadd.f32 0.0, %v2055
      %v2057 = vpop.f32.mrb[0].mxu0
      %2058 = vmatprep.mubr.f32.mxu0 %v1742
      %2059 = vmatmul.mubr.f32.gmra.mrb[0].mxu0 %v1740
      %v2060 = vpop.f32.mrb[0].mxu0
      %v2061 = vadd.f32 0.0, %v2060
      %v2062 = vpop.f32.mrb[0].mxu0
      %2063 = vdwg.mxu0
      %v2064 = vrcp.pop %v1745
      %v2065 = vmul.f32 %v1906, %v2064
      %v2066 = vrcp.pop %v1748
      %v2067 = vmul.f32 %v1911, %v2066
      %v2068 = vrcp.pop %v1751
      %v2069 = vmul.f32 %v1916, %v2068
      %v2070 = vrcp.pop %v1754
      %v2071 = vmul.f32 %v1921, %v2070
      %v2072 = vrcp.pop %v1757
      %v2073 = vmul.f32 %v1926, %v2072
      %v2074 = vrcp.pop %v1760
      %v2075 = vmul.f32 %v1931, %v2074
      %v2076 = vrcp.pop %v1763
      %v2077 = vmul.f32 %v1936, %v2076
      %v2078 = vrcp.pop %v1766
      %v2079 = vmul.f32 %v1941, %v2078
      %v2080 = vrcp.pop %v1769
      %v2081 = vmul.f32 %v1946, %v2080
      %v2082 = vrcp.pop %v1772
      %v2083 = vmul.f32 %v1951, %v2082
      %v2084 = vrcp.pop %v1775
      %v2085 = vmul.f32 %v1956, %v2084
      %v2086 = vrcp.pop %v1778
      %v2087 = vmul.f32 %v1961, %v2086
      %v2088 = vrcp.pop %v1781
      %v2089 = vmul.f32 %v1966, %v2088
      %v2090 = vrcp.pop %v1784
      %v2091 = vmul.f32 %v1971, %v2090
      %v2092 = vrcp.pop %v1787
      %v2093 = vmul.f32 %v1976, %v2092
      %v2094 = vrcp.pop %v1790
      %v2095 = vmul.f32 %v1981, %v2094
      %v2096 = vrcp.pop %v1793
      %v2097 = vmul.f32 %v1986, %v2096
      %v2098 = vrcp.pop %v1796
      %v2099 = vmul.f32 %v1991, %v2098
      %v2100 = vrcp.pop %v1799
      %v2101 = vmul.f32 %v1996, %v2100
      %v2102 = vrcp.pop %v1802
      %v2103 = vmul.f32 %v2001, %v2102
      %v2104 = vrcp.pop %v1805
      %v2105 = vmul.f32 %v2006, %v2104
      %v2106 = vrcp.pop %v1808
      %v2107 = vmul.f32 %v2011, %v2106
      %v2108 = vrcp.pop %v1811
      %v2109 = vmul.f32 %v2016, %v2108
      %v2110 = vrcp.pop %v1814
      %v2111 = vmul.f32 %v2021, %v2110
      %v2112 = vrcp.pop %v1817
      %v2113 = vmul.f32 %v2026, %v2112
      %v2114 = vrcp.pop %v1820
      %v2115 = vmul.f32 %v2031, %v2114
      %v2116 = vrcp.pop %v1823
      %v2117 = vmul.f32 %v2036, %v2116
      %v2118 = vrcp.pop %v1826
      %v2119 = vmul.f32 %v2041, %v2118
      %v2120 = vrcp.pop %v1829
      %v2121 = vmul.f32 %v2046, %v2120
      %v2122 = vrcp.pop %v1832
      %v2123 = vmul.f32 %v2051, %v2122
      %v2124 = vrcp.pop %v1835
      %v2125 = vmul.f32 %v2056, %v2124
      %v2126 = vrcp.pop %v1838
      %v2127 = vmul.f32 %v2061, %v2126
      %2128 = vst.msk [vmem:[%s170] sm:$0xff] %vm212, %v2065
      %2129 = vst.msk [vmem:[%s170 + $0x8] sm:$0xff] %vm212, %v2067
      %2130 = vst.msk [vmem:[%s170 + $0x10] sm:$0xff] %vm212, %v2069
      %2131 = vst.msk [vmem:[%s170 + $0x18] sm:$0xff] %vm212, %v2071
      %2132 = vst.msk [vmem:[%s170 + $0x20] sm:$0xff] %vm212, %v2073
      %2133 = vst.msk [vmem:[%s170 + $0x28] sm:$0xff] %vm212, %v2075
      %2134 = vst.msk [vmem:[%s170 + $0x30] sm:$0xff] %vm212, %v2077
      %2135 = vst.msk [vmem:[%s170 + $0x38] sm:$0xff] %vm212, %v2079
      %2136 = vst.msk [vmem:[%s170 + $0x40] sm:$0xff] %vm212, %v2081
      %2137 = vst.msk [vmem:[%s170 + $0x48] sm:$0xff] %vm212, %v2083
      %2138 = vst.msk [vmem:[%s170 + $0x50] sm:$0xff] %vm212, %v2085
      %2139 = vst.msk [vmem:[%s170 + $0x58] sm:$0xff] %vm212, %v2087
      %2140 = vst.msk [vmem:[%s170 + $0x60] sm:$0xff] %vm212, %v2089
      %2141 = vst.msk [vmem:[%s170 + $0x68] sm:$0xff] %vm212, %v2091
      %2142 = vst.msk [vmem:[%s170 + $0x70] sm:$0xff] %vm212, %v2093
      %2143 = vst.msk [vmem:[%s170 + $0x78] sm:$0xff] %vm212, %v2095
      %2144 = vst.msk [vmem:[%s170 + $0x80] sm:$0xff] %vm212, %v2097
      %2145 = vst.msk [vmem:[%s170 + $0x88] sm:$0xff] %vm212, %v2099
      %2146 = vst.msk [vmem:[%s170 + $0x90] sm:$0xff] %vm212, %v2101
      %2147 = vst.msk [vmem:[%s170 + $0x98] sm:$0xff] %vm212, %v2103
      %2148 = vst.msk [vmem:[%s170 + $0xa0] sm:$0xff] %vm212, %v2105
      %2149 = vst.msk [vmem:[%s170 + $0xa8] sm:$0xff] %vm212, %v2107
      %2150 = vst.msk [vmem:[%s170 + $0xb0] sm:$0xff] %vm212, %v2109
      %2151 = vst.msk [vmem:[%s170 + $0xb8] sm:$0xff] %vm212, %v2111
      %2152 = vst.msk [vmem:[%s170 + $0xc0] sm:$0xff] %vm212, %v2113
      %2153 = vst.msk [vmem:[%s170 + $0xc8] sm:$0xff] %vm212, %v2115
      %2154 = vst.msk [vmem:[%s170 + $0xd0] sm:$0xff] %vm212, %v2117
      %2155 = vst.msk [vmem:[%s170 + $0xd8] sm:$0xff] %vm212, %v2119
      %2156 = vst.msk [vmem:[%s170 + $0xe0] sm:$0xff] %vm212, %v2121
      %2157 = vst.msk [vmem:[%s170 + $0xe8] sm:$0xff] %vm212, %v2123
      %2158 = vst.msk [vmem:[%s170 + $0xf0] sm:$0xff] %vm212, %v2125
      %2159 = vst.msk [vmem:[%s170 + $0xf8] sm:$0xff] %vm212, %v2127
      %p2160 = scmp.lt.s32.totalorder %s14, 1
      %s2161 = scalar_select %p2160, %s14, 1
      %s2162 = smul.addr %s2161, 32
      %s2163 = smul.addr %s2162, 8
      %s2164 = scalar_lea.vmem %s3, %s2163
      // Predicated region
      $region33: #{tpu_custom_call.1} parent=31 // pred_check
        %p2165 = pneg %p100
      $region34: #{tpu_custom_call.1} parent=31 // pred_check_branch
        %2167 = sbr.rel (%p2165) target = $region36
      $region35: #{tpu_custom_call.1} parent=31 // pred_region
        _
      $region36: #{tpu_custom_call.1} parent=31 // pred_fallthru
        _
    $region32: #{tpu_custom_call.1} parent=5 // pred_fallthru
      _
    %p2168 = scmp.le.s32.totalorder 2, %s9
    // Predicated region
    $region37: #{tpu_custom_call.1} parent=5 // pred_check
      %p2169 = pneg %p2168
    $region38: #{tpu_custom_call.1} parent=5 // pred_check_branch
      %2171 = sbr.rel (%p2169) target = $region40
    $region39: #{tpu_custom_call.1} parent=5 // pred_region
      %s2172 = ssub.s32 %s9, 2
      // Predicated region
      $region41: #{tpu_custom_call.1} parent=39 // pred_check
        %p2173 = pneg %p106
      $region42: #{tpu_custom_call.1} parent=39 // pred_check_branch
        %2175 = sbr.rel (%p2173) target = $region44
      $region43: #{tpu_custom_call.1} parent=39 // pred_region
        %p2176 = scmp.lt.s32.totalorder %s15, 1
        %s2177 = scalar_select %p2176, %s15, 1
        %s2178 = smul.addr %s2177, 32
        %s2179 = smul.addr %s2178, 8
        %s2180 = scalar_lea.vmem %s3, %s2179
      $region44: #{tpu_custom_call.1} parent=39 // pred_fallthru
        _
    $region40: #{tpu_custom_call.1} parent=5 // pred_fallthru
      _
  $region6: #{tpu_custom_call.1} parent=0 // loop_footer
    %s13 = sadd.s32 1, %s9
  $region7: #{tpu_custom_call.1} parent=0 // loop_footer_branch
    %8 = sbr.rel target = $region3
  $region8: #{tpu_custom_call.1} parent=0 // loop_exit
    _

</llo_original>
